<compile_context>
chip_gen: v6e
topology: v6e:2x2x1
jax: 0.10.0
libtpu: 0.0.40
codegen_flags: <defaults>
</compile_context>

<pallas_src>
import functools

import jax
import jax.numpy as jnp
from jax.experimental import pallas as pl
from jax.experimental.pallas import tpu as pltpu

_MIB = 1 << 20


# ----------------------------------------------------------------------------
# Kernels
# ----------------------------------------------------------------------------

def _se_fused_kernel(x_ref, w1_ref, b1_ref, w2_ref, b2_ref, alpha_ref, o_ref,
                     *, hw):
    """Single-pass SE on a (Bt, C, HW) slab: pool + excite + scale.

    w1_ref: (Cr, C) (PyTorch Linear layout), w2_ref: (C, Cr),
    b1_ref: (1, Cr), b2_ref: (C, 1), alpha_ref: (1,) scalar in SMEM.
    All excitation math in f32 on the VPU/XLU (lane reductions only).
    """
    xv = x_ref[...].astype(jnp.float32)                          # (Bt, C, HW)
    pooled = jnp.sum(xv, axis=-1) * (1.0 / hw)                   # (Bt, C)

    # FC1: h[b, j] = sum_c pooled[b, c] * W1[j, c]   (lane reduce over C)
    h = jnp.sum(pooled[:, None, :] * w1_ref[...][None, :, :],
                axis=-1) + b1_ref[...]                           # (Bt, Cr)
    alpha = alpha_ref[0]
    h = jnp.where(h >= 0.0, h, alpha * h)                        # PReLU

    # FC2: s[b, c] = sum_j h[b, j] * W2[c, j]        (lane reduce over Cr)
    s = jnp.sum(h[:, None, :] * w2_ref[...][None, :, :],
                axis=-1, keepdims=True) + b2_ref[...]            # (Bt, C, 1)
    s = jax.nn.sigmoid(s)                                        # f32 gate

    # Scale in f32, single cast on store; x_ref is re-indexed here so the slab
    # is not held live across the excitation chain.
    o_ref[...] = (x_ref[...].astype(jnp.float32) * s).astype(o_ref.dtype)


def _se_pool_gate_kernel(x_ref, w1t_ref, b1_ref, w2_ref, b2_ref, alpha_ref,
                         s_ref, acc_ref, *, hw):
    """Two-pass fallback, pass 1: HW-tiled pool + excite -> gates (1, C, 1)."""
    t = pl.program_id(1)

    @pl.when(t == 0)
    def _():
        acc_ref[...] = jnp.zeros_like(acc_ref)

    xv = x_ref[0].astype(jnp.float32)                            # (C, Thw)
    thw = xv.shape[-1]
    lane = jax.lax.broadcasted_iota(jnp.int32, xv.shape, 1)
    valid = (t * thw + lane) < hw                                # mask OOB tail
    acc_ref[...] += jnp.sum(jnp.where(valid, xv, 0.0), axis=-1, keepdims=True)

    @pl.when(t == pl.num_programs(1) - 1)
    def _():
        pooled = acc_ref[...] * (1.0 / hw)                       # (C, 1) true mean
        h = jnp.sum(w1t_ref[...] * pooled, axis=0,
                    keepdims=True) + b1_ref[...]                 # (1, Cr)
        alpha = alpha_ref[0]
        h = jnp.where(h >= 0.0, h, alpha * h)                    # PReLU
        s = jnp.sum(w2_ref[...] * h, axis=-1,
                    keepdims=True) + b2_ref[...]                 # (C, 1)
        s_ref[0] = jax.nn.sigmoid(s)


def _se_scale_kernel(x_ref, s_ref, o_ref):
    """Two-pass fallback, pass 2: out = x * gate (f32 math, cast on store)."""
    o_ref[...] = (x_ref[...].astype(jnp.float32) * s_ref[...]).astype(o_ref.dtype)


# ----------------------------------------------------------------------------
# Wrapper
# ----------------------------------------------------------------------------

def _vmem_limit_bytes():
    """VMEM request derived from the local chip, with real headroom."""
    cap = None
    try:
        cap = getattr(pltpu.get_tpu_info(), "vmem_capacity_bytes", None)
    except Exception:
        cap = None
    if not cap or cap <= 0:
        cap = 64 * _MIB                     # v7x-safe conservative default
    # ~54 MiB on v7x (64 MiB physical), ~108 MiB on v5e/v6e (128 MiB physical).
    return int(min(cap - 8 * _MIB, int(0.85 * cap)))


def _largest_divisor_leq(n, cap):
    cap = max(1, min(n, int(cap)))
    best = 1
    for d in range(1, cap + 1):
        if n % d == 0:
            best = d
    return best


def se_block(x, w1, b1, alpha, w2, b2, *, donate_x=False,
             force_two_pass=False, hw_tile=None):
    """SEBlock forward.  x: (B, C, H, W); weights in PyTorch Linear (out, in)."""
    B, C, H, W = x.shape
    Cr = w1.shape[0]
    HW = H * W

    x_flat = x.reshape(B, C, HW)                     # view; no HBM transpose
    w1_f = w1.astype(jnp.float32)                    # (Cr, C)
    w2_f = w2.astype(jnp.float32)                    # (C, Cr)
    b1_row = b1.reshape(1, Cr).astype(jnp.float32)
    b2_col = b2.reshape(C, 1).astype(jnp.float32)
    alpha_arr = jnp.asarray(alpha, jnp.float32).reshape(1)

    itemsize = x.dtype.itemsize
    slab_bytes = C * HW * itemsize                   # one image
    param_bytes = (w1_f.size + w2_f.size + b1_row.size + b2_col.size) * 4

    vmem_limit = _vmem_limit_bytes()
    headroom = 2 * _MIB
    # Single-pass budget: double-buffered x-in + out blocks, resident params.
    block_budget = (vmem_limit - 2 * param_bytes - headroom) // 4

    if (not force_two_pass) and 0 < slab_bytes <= block_budget:
        # ---- single-pass read-once/write-once path, Bt images per grid step -
        soft_target = max(slab_bytes, min(block_budget, 8 * _MIB))
        bt = _largest_divisor_leq(B, soft_target // slab_bytes)
        out_flat = pl.pallas_call(
            functools.partial(_se_fused_kernel, hw=HW),
            out_shape=jax.ShapeDtypeStruct((B, C, HW), x.dtype),
            grid_spec=pltpu.PrefetchScalarGridSpec(
                num_scalar_prefetch=0,
                grid=(B // bt,),
                in_specs=[
                    pl.BlockSpec((bt, C, HW), lambda i: (i, 0, 0)),    # x slab
                    pl.BlockSpec((Cr, C), lambda i: (0, 0)),           # W1 (resident)
                    pl.BlockSpec((1, Cr), lambda i: (0, 0)),           # b1 row
                    pl.BlockSpec((C, Cr), lambda i: (0, 0)),           # W2 (resident)
                    pl.BlockSpec((C, 1), lambda i: (0, 0)),            # b2 col
                    pl.BlockSpec(memory_space=pltpu.MemorySpace.SMEM), # PReLU alpha
                ],
                out_specs=pl.BlockSpec((bt, C, HW), lambda i: (i, 0, 0)),
            ),
            compiler_params=pltpu.CompilerParams(
                dimension_semantics=("parallel",),
                vmem_limit_bytes=vmem_limit),
            input_output_aliases=({0: 0} if donate_x else {}),
        )(x_flat, w1_f, b1_row, w2_f, b2_col, alpha_arr)
        return out_flat.reshape(B, C, H, W)

    # ---- two-pass HW-tiled fallback: slab exceeds the single-pass budget ----
    lane = 128
    if hw_tile is None:
        thw_budget = (vmem_limit - 4 * _MIB) // (4 * C * itemsize)
        hw_tile = min(thw_budget, pl.cdiv(HW, lane) * lane)
    thw = max(lane, (int(hw_tile) // lane) * lane)
    n_t = pl.cdiv(HW, thw)

    w1t = jnp.transpose(w1_f)                                    # (C, Cr)

    # Pass 1: pool over HW tiles + excite -> f32 gates (B, C, 1).
    gates = pl.pallas_call(
        functools.partial(_se_pool_gate_kernel, hw=HW),
        out_shape=jax.ShapeDtypeStruct((B, C, 1), jnp.float32),
        grid_spec=pltpu.PrefetchScalarGridSpec(
            num_scalar_prefetch=0,
            grid=(B, n_t),
            in_specs=[
                pl.BlockSpec((1, C, thw), lambda b, t: (b, 0, t)),
                pl.BlockSpec((C, Cr), lambda b, t: (0, 0)),
                pl.BlockSpec((1, Cr), lambda b, t: (0, 0)),
                pl.BlockSpec((C, Cr), lambda b, t: (0, 0)),
                pl.BlockSpec((C, 1), lambda b, t: (0, 0)),
                pl.BlockSpec(memory_space=pltpu.MemorySpace.SMEM),
            ],
            out_specs=pl.BlockSpec((1, C, 1), lambda b, t: (b, 0, 0)),
            scratch_shapes=[pltpu.VMEM((C, 1), jnp.float32)],
        ),
        compiler_params=pltpu.CompilerParams(
            dimension_semantics=("parallel", "arbitrary"),
            vmem_limit_bytes=vmem_limit),
    )(x_flat, w1t, b1_row, w2_f, b2_col, alpha_arr)

    # Pass 2: scale; both grid axes parallel (uses both v7x TCs even at B=1).
    out_flat = pl.pallas_call(
        _se_scale_kernel,
        out_shape=jax.ShapeDtypeStruct((B, C, HW), x.dtype),
        grid_spec=pltpu.PrefetchScalarGridSpec(
            num_scalar_prefetch=0,
            grid=(B, n_t),
            in_specs=[
                pl.BlockSpec((1, C, thw), lambda b, t: (b, 0, t)),
                pl.BlockSpec((1, C, 1), lambda b, t: (b, 0, 0)),
            ],
            out_specs=pl.BlockSpec((1, C, thw), lambda b, t: (b, 0, t)),
        ),
        compiler_params=pltpu.CompilerParams(
            dimension_semantics=("parallel", "parallel"),
            vmem_limit_bytes=vmem_limit),
        input_output_aliases=({0: 0} if donate_x else {}),
    )(x_flat, gates)
    return out_flat.reshape(B, C, H, W)


def se_block_ref(x, w1, b1, alpha, w2, b2):
    """Pure-JAX reference mirroring the PyTorch forward (f32 math)."""
    x32 = x.astype(jnp.float32)
    y = jnp.mean(x32, axis=(2, 3))                     # (B, C)
    y = y @ w1.T.astype(jnp.float32) + b1              # (B, Cr)
    y = jnp.where(y >= 0.0, y, alpha * y)              # PReLU (single alpha)
    y = y @ w2.T.astype(jnp.float32) + b2              # (B, C)
    y = jax.nn.sigmoid(y)
    return x32 * y[:, :, None, None]


if __name__ == "__main__":
    key = jax.random.PRNGKey(0)
    kx, k1, kb1, k2, kb2, kx2 = jax.random.split(key, 6)

    # --- test 1: f32, single-pass batched path (multiple images / grid step) -
    B, C, H, W = 2, 64, 16, 16
    reduction = 16
    Cr = C // reduction  # 4

    x = jax.random.normal(kx, (B, C, H, W), dtype=jnp.float32)
    # PyTorch Linear weight shape = (out, in).
    w1 = 0.1 * jax.random.normal(k1, (Cr, C), dtype=jnp.float32)
    b1 = 0.1 * jax.random.normal(kb1, (Cr,), dtype=jnp.float32)
    w2 = 0.1 * jax.random.normal(k2, (C, Cr), dtype=jnp.float32)
    b2 = 0.1 * jax.random.normal(kb2, (C,), dtype=jnp.float32)
    alpha = jnp.float32(0.25)  # nn.PReLU() default: single parameter, init 0.25

    out = se_block(x, w1, b1, alpha, w2, b2)
    jax.block_until_ready(out)
    ref = se_block_ref(x, w1, b1, alpha, w2, b2)
    assert out.shape == (B, C, H, W)
    assert jnp.allclose(out, ref, atol=1e-5, rtol=1e-5), "f32 single-pass mismatch"

    # --- test 2: bf16 activations (halves HBM bytes; math stays f32) ---------
    x_bf16 = x.astype(jnp.bfloat16)
    out_bf16 = se_block(x_bf16, w1, b1, alpha, w2, b2)
    jax.block_until_ready(out_bf16)
    ref_bf16 = se_block_ref(x_bf16, w1, b1, alpha, w2, b2)
    assert out_bf16.dtype == jnp.bfloat16
    assert jnp.allclose(out_bf16.astype(jnp.float32), ref_bf16,
                        atol=2e-2, rtol=2e-2), "bf16 single-pass mismatch"

    # --- test 3: forced two-pass HW-tiled fallback (tail-masked pooling) -----
    B3, C3, H3, W3 = 2, 32, 12, 12            # HW = 144 -> 2 tiles of 128
    Cr3 = C3 // reduction                     # 2
    x3 = jax.random.normal(kx2, (B3, C3, H3, W3), dtype=jnp.float32)
    w1_3 = 0.1 * jax.random.normal(k1, (Cr3, C3), dtype=jnp.float32)
    b1_3 = 0.1 * jax.random.normal(kb1, (Cr3,), dtype=jnp.float32)
    w2_3 = 0.1 * jax.random.normal(k2, (C3, Cr3), dtype=jnp.float32)
    b2_3 = 0.1 * jax.random.normal(kb2, (C3,), dtype=jnp.float32)

    out3 = se_block(x3, w1_3, b1_3, alpha, w2_3, b2_3,
                    force_two_pass=True, hw_tile=128)
    jax.block_until_ready(out3)
    ref3 = se_block_ref(x3, w1_3, b1_3, alpha, w2_3, b2_3)
    assert jnp.allclose(out3, ref3, atol=1e-5, rtol=1e-5), "two-pass mismatch"

    print("KERNEL_OK")
</pallas_src>

<mosaic_0001>
module attributes {stable_mosaic.version = 11 : i64} {
  func.func @_se_fused_kernel(%arg0: i32, %arg1: memref<2x64x256xf32, #tpu.memory_space<vmem>>, %arg2: memref<4x64xf32, #tpu.memory_space<vmem>>, %arg3: memref<1x4xf32, #tpu.memory_space<vmem>>, %arg4: memref<64x4xf32, #tpu.memory_space<vmem>>, %arg5: memref<64x1xf32, #tpu.memory_space<vmem>>, %arg6: memref<1xf32, #tpu.memory_space<smem>>, %arg7: memref<2x64x256xf32, #tpu.memory_space<vmem>>) attributes {dimension_semantics = [#tpu.dimension_semantics<parallel>], iteration_bounds = array<i64: 1>, scalar_prefetch = 0 : i64, scratch_operands = 0 : i64, tpu.core_type = #tpu.core_type<tc>, window_params = [{transform_indices = @transform_0, window_bounds = array<i64: 2, 64, 256>}, {pipeline_mode = #tpu.pipeline_mode<synchronous>, transform_indices = @transform_1, window_bounds = array<i64: 4, 64>}, {pipeline_mode = #tpu.pipeline_mode<synchronous>, transform_indices = @transform_2, window_bounds = array<i64: 1, 4>}, {pipeline_mode = #tpu.pipeline_mode<synchronous>, transform_indices = @transform_3, window_bounds = array<i64: 64, 4>}, {pipeline_mode = #tpu.pipeline_mode<synchronous>, transform_indices = @transform_4, window_bounds = array<i64: 64, 1>}, {transform_indices = @transform_5, window_bounds = array<i64: 1>}, {transform_indices = @transform_6, window_bounds = array<i64: 2, 64, 256>}]} {
    %c0 = arith.constant 0 : index
    %c0_0 = arith.constant 0 : index
    %c0_1 = arith.constant 0 : index
    %0 = vector.load %arg1[%c0, %c0_0, %c0_1] : memref<2x64x256xf32, #tpu.memory_space<vmem>>, vector<2x64x256xf32>
    %cst = arith.constant dense<0.000000e+00> : vector<2x64xf32>
    %1 = vector.multi_reduction <add>, %0, %cst [2] : vector<2x64x256xf32> to vector<2x64xf32>
    %cst_2 = arith.constant 3.906250e-03 : f32
    %2 = vector.broadcast %cst_2 : f32 to vector<2x64xf32>
    %3 = arith.mulf %1, %2 : vector<2x64xf32>
    %4 = vector.shape_cast %3 : vector<2x64xf32> to vector<2x1x64xf32>
    %c0_3 = arith.constant 0 : index
    %c0_4 = arith.constant 0 : index
    %5 = vector.load %arg2[%c0_3, %c0_4] : memref<4x64xf32, #tpu.memory_space<vmem>>, vector<4x64xf32>
    %6 = vector.shape_cast %5 : vector<4x64xf32> to vector<1x4x64xf32>
    %7 = vector.broadcast %4 : vector<2x1x64xf32> to vector<2x4x64xf32>
    %8 = vector.broadcast %6 : vector<1x4x64xf32> to vector<2x4x64xf32>
    %9 = arith.mulf %7, %8 : vector<2x4x64xf32>
    %cst_5 = arith.constant dense<0.000000e+00> : vector<2x4xf32>
    %10 = vector.multi_reduction <add>, %9, %cst_5 [2] : vector<2x4x64xf32> to vector<2x4xf32>
    %c0_6 = arith.constant 0 : index
    %c0_7 = arith.constant 0 : index
    %11 = vector.load %arg3[%c0_6, %c0_7] : memref<1x4xf32, #tpu.memory_space<vmem>>, vector<1x4xf32>
    %12 = vector.broadcast %11 : vector<1x4xf32> to vector<2x4xf32>
    %13 = arith.addf %10, %12 : vector<2x4xf32>
    %c0_8 = arith.constant 0 : index
    %14 = memref.load %arg6[%c0_8] : memref<1xf32, #tpu.memory_space<smem>>
    %cst_9 = arith.constant 0.000000e+00 : f32
    %15 = vector.broadcast %cst_9 : f32 to vector<2x4xf32>
    %16 = arith.cmpf oge, %13, %15 : vector<2x4xf32>
    %17 = vector.broadcast %14 : f32 to vector<2x4xf32>
    %18 = arith.mulf %17, %13 : vector<2x4xf32>
    %19 = arith.select %16, %13, %18 : vector<2x4xi1>, vector<2x4xf32>
    %20 = vector.shape_cast %19 : vector<2x4xf32> to vector<2x1x4xf32>
    %c0_10 = arith.constant 0 : index
    %c0_11 = arith.constant 0 : index
    %21 = vector.load %arg4[%c0_10, %c0_11] : memref<64x4xf32, #tpu.memory_space<vmem>>, vector<64x4xf32>
    %22 = vector.shape_cast %21 : vector<64x4xf32> to vector<1x64x4xf32>
    %23 = vector.broadcast %20 : vector<2x1x4xf32> to vector<2x64x4xf32>
    %24 = vector.broadcast %22 : vector<1x64x4xf32> to vector<2x64x4xf32>
    %25 = arith.mulf %23, %24 : vector<2x64x4xf32>
    %cst_12 = arith.constant dense<0.000000e+00> : vector<2x64xf32>
    %26 = vector.multi_reduction <add>, %25, %cst_12 [2] : vector<2x64x4xf32> to vector<2x64xf32>
    %27 = vector.shape_cast %26 : vector<2x64xf32> to vector<2x64x1xf32>
    %c0_13 = arith.constant 0 : index
    %c0_14 = arith.constant 0 : index
    %28 = vector.load %arg5[%c0_13, %c0_14] : memref<64x1xf32, #tpu.memory_space<vmem>>, vector<64x1xf32>
    %29 = vector.shape_cast %28 : vector<64x1xf32> to vector<1x64x1xf32>
    %30 = vector.broadcast %29 : vector<1x64x1xf32> to vector<2x64x1xf32>
    %31 = arith.addf %27, %30 : vector<2x64x1xf32>
    %32 = arith.negf %31 : vector<2x64x1xf32>
    %33 = math.exp %32 : vector<2x64x1xf32>
    %cst_15 = arith.constant 1.000000e+00 : f32
    %34 = vector.broadcast %cst_15 : f32 to vector<2x64x1xf32>
    %35 = arith.addf %34, %33 : vector<2x64x1xf32>
    %36 = arith.divf %34, %35 : vector<2x64x1xf32>
    %c0_16 = arith.constant 0 : index
    %c0_17 = arith.constant 0 : index
    %c0_18 = arith.constant 0 : index
    %37 = vector.load %arg1[%c0_16, %c0_17, %c0_18] : memref<2x64x256xf32, #tpu.memory_space<vmem>>, vector<2x64x256xf32>
    %38 = vector.broadcast %36 : vector<2x64x1xf32> to vector<2x64x256xf32>
    %39 = arith.mulf %37, %38 : vector<2x64x256xf32>
    %c0_19 = arith.constant 0 : index
    %c0_20 = arith.constant 0 : index
    %c0_21 = arith.constant 0 : index
    %40 = vector.load %arg7[%c0_19, %c0_20, %c0_21] : memref<2x64x256xf32, #tpu.memory_space<vmem>>, vector<2x64x256xf32>
    tpu.vector_store %arg7[%c0_19, %c0_20, %c0_21], %39 {strides = array<i32>} : memref<2x64x256xf32, #tpu.memory_space<vmem>>, vector<2x64x256xf32>,
    return
  }
  func.func @transform_0(%arg0: i32) -> (i32, i32, i32) {
    %c0_i32 = arith.constant 0 : i32
    %c0_i32_0 = arith.constant 0 : i32
    %c0_i32_1 = arith.constant 0 : i32
    return %arg0, %c0_i32, %c0_i32_0 : i32, i32, i32
  }
  func.func @transform_1(%arg0: i32) -> (i32, i32) {
    %c0_i32 = arith.constant 0 : i32
    %c0_i32_0 = arith.constant 0 : i32
    %c0_i32_1 = arith.constant 0 : i32
    return %c0_i32, %c0_i32_0 : i32, i32
  }
  func.func @transform_2(%arg0: i32) -> (i32, i32) {
    %c0_i32 = arith.constant 0 : i32
    %c0_i32_0 = arith.constant 0 : i32
    %c0_i32_1 = arith.constant 0 : i32
    return %c0_i32, %c0_i32_0 : i32, i32
  }
  func.func @transform_3(%arg0: i32) -> (i32, i32) {
    %c0_i32 = arith.constant 0 : i32
    %c0_i32_0 = arith.constant 0 : i32
    %c0_i32_1 = arith.constant 0 : i32
    return %c0_i32, %c0_i32_0 : i32, i32
  }
  func.func @transform_4(%arg0: i32) -> (i32, i32) {
    %c0_i32 = arith.constant 0 : i32
    %c0_i32_0 = arith.constant 0 : i32
    %c0_i32_1 = arith.constant 0 : i32
    return %c0_i32, %c0_i32_0 : i32, i32
  }
  func.func @transform_5(%arg0: i32) -> i32 {
    %c0_i32 = arith.constant 0 : i32
    %c0_i32_0 = arith.constant 0 : i32
    return %c0_i32 : i32
  }
  func.func @transform_6(%arg0: i32) -> (i32, i32, i32) {
    %c0_i32 = arith.constant 0 : i32
    %c0_i32_0 = arith.constant 0 : i32
    %c0_i32_1 = arith.constant 0 : i32
    return %arg0, %c0_i32, %c0_i32_0 : i32, i32, i32
  }
}

</mosaic_0001>

<llo_original>
// kernel: tpu_custom_call.1
$region0: #{tpu_custom_call.1}
  #allocation0 [shape = 'u32[]', space=smem, size = 0x4, offset = 0x4, fixed_abs, tag = 'smem constant byte address 0x4 - core index']
  #allocation1 [shape = 'u32[144,128]{1,0:T(1,128)}', space=vmem, size = 0x12000, scoped, tag = 'internal scratch']
  #allocation2 [shape = 'f32[1]{0:T(128)S(6)}', space=smem, size = 0x200, scoped, tag = 'scoped memory for tpu_custom_call.1']
  %s0 = inlined_call_operand.hbm [shape: f32[2,64,256], index: 0, kind: input, shape index: {}]
  %s1 = inlined_call_operand.vmem [shape: f32[4,64], index: 1, kind: input, shape index: {}]
  %s2 = inlined_call_operand.vmem [shape: f32[1,4], index: 2, kind: input, shape index: {}]
  %s3 = inlined_call_operand.vmem [shape: f32[64,4], index: 3, kind: input, shape index: {}]
  %s4 = inlined_call_operand.vmem [shape: f32[64,1], index: 4, kind: input, shape index: {}]
  %s5 = inlined_call_operand.<no memory space> [shape: f32[1], index: 5, kind: input, shape index: {}]
  %s6 = inlined_call_operand.hbm [shape: f32[2,64,256], index: 6, kind: output, shape index: {}]
  %s7 = sld [smem:[#allocation0]]
  $region38: #{tpu_custom_call.1} parent=0
    _
  %s9 = ssub.s32 1, %s7
  %s10 = scalar_select 0, %s9, %s7
  %11 = sst [smem:[#allocation2]] %s5
  $region1: #{tpu_custom_call.1} parent=0
    #allocation3 [shape = 'u8[131072]{0}', space=vmem, size = 0x20000, scoped, tag = 'input window, operand 0, single buffered']
    #allocation4 [shape = 's32[1]{0}', space=sflag, size = 0x4, scoped, tag = 'scoped memory for tpu_custom_call.1']
    #allocation5 [shape = 's32[1]{0}', space=sflag, size = 0x4, scoped, tag = 'scoped memory for tpu_custom_call.1']
    #allocation6 [shape = 'u8[131072]{0}', space=vmem, size = 0x20000, scoped, tag = 'output window, operand 0, single buffered']
    %12 = vsyncpa [#allocation4], 0
    %13 = vsyncpa [#allocation5], 0
    // Predicated region
    $region2: #{tpu_custom_call.1} parent=1 // pred_check
      _
    $region3: #{tpu_custom_call.1} parent=1 // pred_check_branch
      %15 = sbr.rel (0) target = $region5
    $region4: #{tpu_custom_call.1} parent=1 // pred_region
      %s17 = ssub.s32 4096, 4096
      %18 = vsyncadd [#allocation4], %s17
      %s19 = sshll.u32 [#allocation3], 4
      %s20 = int_to_ptr.vmem [resolvable:$true] %s19
      %25 = dma.hbm_to_vmem [thread:$0]  %s0, 4096, %s20, [#allocation4], 256, 256, 16
    $region5: #{tpu_custom_call.1} parent=1 // pred_fallthru
      _
    // Predicated region
    $region6: #{tpu_custom_call.1} parent=1 // pred_check
      _
    $region7: #{tpu_custom_call.1} parent=1 // pred_check_branch
      %27 = sbr.rel (0) target = $region9
    $region8: #{tpu_custom_call.1} parent=1 // pred_region
      _
    $region9: #{tpu_custom_call.1} parent=1 // pred_fallthru
      _
    // Predicated region
    $region10: #{tpu_custom_call.1} parent=1 // pred_check
      _
    $region11: #{tpu_custom_call.1} parent=1 // pred_check_branch
      %29 = sbr.rel (0) target = $region13
    $region12: #{tpu_custom_call.1} parent=1 // pred_region
      _
    $region13: #{tpu_custom_call.1} parent=1 // pred_fallthru
      _
    // Predicated region
    $region14: #{tpu_custom_call.1} parent=1 // pred_check
      _
    $region15: #{tpu_custom_call.1} parent=1 // pred_check_branch
      %31 = sbr.rel (0) target = $region17
    $region16: #{tpu_custom_call.1} parent=1 // pred_region
      _
    $region17: #{tpu_custom_call.1} parent=1 // pred_fallthru
      _
    // Predicated region
    $region18: #{tpu_custom_call.1} parent=1 // pred_check
      _
    $region19: #{tpu_custom_call.1} parent=1 // pred_check_branch
      %33 = sbr.rel (0) target = $region21
    $region20: #{tpu_custom_call.1} parent=1 // pred_region
      _
    $region21: #{tpu_custom_call.1} parent=1 // pred_fallthru
      _
    // Predicated region
    $region22: #{tpu_custom_call.1} parent=1 // pred_check
      _
    $region23: #{tpu_custom_call.1} parent=1 // pred_check_branch
      %35 = sbr.rel (0) target = $region25
    $region24: #{tpu_custom_call.1} parent=1 // pred_region
      _
    $region25: #{tpu_custom_call.1} parent=1 // pred_fallthru
      _
    // Predicated region
    $region26: #{tpu_custom_call.1} parent=1 // pred_check
      _
    $region27: #{tpu_custom_call.1} parent=1 // pred_check_branch
      %37 = sbr.rel (0) target = $region29
    $region28: #{tpu_custom_call.1} parent=1 // pred_region
      %38 = dma.done [#allocation4], 4096
    $region29: #{tpu_custom_call.1} parent=1 // pred_fallthru
      _
    %v39 = vld [vmem:[#allocation3] sm:$0xff]
    %v40 = vld [vmem:[#allocation3 + $0x8] sm:$0xff]
    %v41 = vld [vmem:[#allocation3 + $0x10] sm:$0xff]
    %v42 = vld [vmem:[#allocation3 + $0x18] sm:$0xff]
    %v43 = vld [vmem:[#allocation3 + $0x20] sm:$0xff]
    %v44 = vld [vmem:[#allocation3 + $0x28] sm:$0xff]
    %v45 = vld [vmem:[#allocation3 + $0x30] sm:$0xff]
    %v46 = vld [vmem:[#allocation3 + $0x38] sm:$0xff]
    %v47 = vld [vmem:[#allocation3 + $0x40] sm:$0xff]
    %v48 = vld [vmem:[#allocation3 + $0x48] sm:$0xff]
    %v49 = vld [vmem:[#allocation3 + $0x50] sm:$0xff]
    %v50 = vld [vmem:[#allocation3 + $0x58] sm:$0xff]
    %v51 = vld [vmem:[#allocation3 + $0x60] sm:$0xff]
    %v52 = vld [vmem:[#allocation3 + $0x68] sm:$0xff]
    %v53 = vld [vmem:[#allocation3 + $0x70] sm:$0xff]
    %v54 = vld [vmem:[#allocation3 + $0x78] sm:$0xff]
    %v55 = vld [vmem:[#allocation3 + $0x80] sm:$0xff]
    %v56 = vld [vmem:[#allocation3 + $0x88] sm:$0xff]
    %v57 = vld [vmem:[#allocation3 + $0x90] sm:$0xff]
    %v58 = vld [vmem:[#allocation3 + $0x98] sm:$0xff]
    %v59 = vld [vmem:[#allocation3 + $0xa0] sm:$0xff]
    %v60 = vld [vmem:[#allocation3 + $0xa8] sm:$0xff]
    %v61 = vld [vmem:[#allocation3 + $0xb0] sm:$0xff]
    %v62 = vld [vmem:[#allocation3 + $0xb8] sm:$0xff]
    %v63 = vld [vmem:[#allocation3 + $0xc0] sm:$0xff]
    %v64 = vld [vmem:[#allocation3 + $0xc8] sm:$0xff]
    %v65 = vld [vmem:[#allocation3 + $0xd0] sm:$0xff]
    %v66 = vld [vmem:[#allocation3 + $0xd8] sm:$0xff]
    %v67 = vld [vmem:[#allocation3 + $0xe0] sm:$0xff]
    %v68 = vld [vmem:[#allocation3 + $0xe8] sm:$0xff]
    %v69 = vld [vmem:[#allocation3 + $0xf0] sm:$0xff]
    %v70 = vld [vmem:[#allocation3 + $0xf8] sm:$0xff]
    %v71 = vadd.f32 %v39, %v40
    %72 = vadd.xlane.f32.xlu0 %v71
    %v73 = vpop.xlane.xlu0 %72
    %v74 = vadd.f32 %v41, %v42
    %75 = vadd.xlane.f32.xlu0 %v74
    %v76 = vpop.xlane.xlu0 %75
    %v77 = vadd.f32 %v43, %v44
    %78 = vadd.xlane.f32.xlu0 %v77
    %v79 = vpop.xlane.xlu0 %78
    %v80 = vadd.f32 %v45, %v46
    %81 = vadd.xlane.f32.xlu0 %v80
    %v82 = vpop.xlane.xlu0 %81
    %v83 = vadd.f32 %v47, %v48
    %84 = vadd.xlane.f32.xlu0 %v83
    %v85 = vpop.xlane.xlu0 %84
    %v86 = vadd.f32 %v49, %v50
    %87 = vadd.xlane.f32.xlu0 %v86
    %v88 = vpop.xlane.xlu0 %87
    %v89 = vadd.f32 %v51, %v52
    %90 = vadd.xlane.f32.xlu0 %v89
    %v91 = vpop.xlane.xlu0 %90
    %v92 = vadd.f32 %v53, %v54
    %93 = vadd.xlane.f32.xlu0 %v92
    %v94 = vpop.xlane.xlu0 %93
    %v95 = vadd.f32 %v55, %v56
    %96 = vadd.xlane.f32.xlu0 %v95
    %v97 = vpop.xlane.xlu0 %96
    %v98 = vadd.f32 %v57, %v58
    %99 = vadd.xlane.f32.xlu0 %v98
    %v100 = vpop.xlane.xlu0 %99
    %v101 = vadd.f32 %v59, %v60
    %102 = vadd.xlane.f32.xlu0 %v101
    %v103 = vpop.xlane.xlu0 %102
    %v104 = vadd.f32 %v61, %v62
    %105 = vadd.xlane.f32.xlu0 %v104
    %v106 = vpop.xlane.xlu0 %105
    %v107 = vadd.f32 %v63, %v64
    %108 = vadd.xlane.f32.xlu0 %v107
    %v109 = vpop.xlane.xlu0 %108
    %v110 = vadd.f32 %v65, %v66
    %111 = vadd.xlane.f32.xlu0 %v110
    %v112 = vpop.xlane.xlu0 %111
    %v113 = vadd.f32 %v67, %v68
    %114 = vadd.xlane.f32.xlu0 %v113
    %v115 = vpop.xlane.xlu0 %114
    %v116 = vadd.f32 %v69, %v70
    %117 = vadd.xlane.f32.xlu0 %v116
    %v118 = vpop.xlane.xlu0 %117
    %v119 = vmul.f32 %v73, 0.00390625
    %v120 = vmul.f32 %v76, 0.00390625
    %v121 = vmul.f32 %v79, 0.00390625
    %v122 = vmul.f32 %v82, 0.00390625
    %v123 = vmul.f32 %v85, 0.00390625
    %v124 = vmul.f32 %v88, 0.00390625
    %v125 = vmul.f32 %v91, 0.00390625
    %v126 = vmul.f32 %v94, 0.00390625
    %v127 = vmul.f32 %v97, 0.00390625
    %v128 = vmul.f32 %v100, 0.00390625
    %v129 = vmul.f32 %v103, 0.00390625
    %v130 = vmul.f32 %v106, 0.00390625
    %v131 = vmul.f32 %v109, 0.00390625
    %v132 = vmul.f32 %v112, 0.00390625
    %v133 = vmul.f32 %v115, 0.00390625
    %v134 = vmul.f32 %v118, 0.00390625
    %v135 = vld [vmem:[%s1] sm:$0xf]
    %v137 = vlaneseq
    %v138 = vshrl.u32 %v137, 7
    %v139 = vsub.s32 0, %v138
    %v140 = vrot.slane %v135, %v139
    %142 = vbcast.lane.b32.xlu0 %v140, 256
    %v143 = vpop.permute.xlu0 %142
    %s145 = sor.u32 256, 8
    %146 = vbcast.lane.b32.xlu0 %v140, %s145
    %v147 = vpop.permute.xlu0 %146
    %s149 = sor.u32 256, 16
    %150 = vbcast.lane.b32.xlu0 %v140, %s149
    %v151 = vpop.permute.xlu0 %150
    %s153 = sor.u32 256, 24
    %154 = vbcast.lane.b32.xlu0 %v140, %s153
    %v155 = vpop.permute.xlu0 %154
    %s157 = sor.u32 256, 32
    %158 = vbcast.lane.b32.xlu0 %v140, %s157
    %v159 = vpop.permute.xlu0 %158
    %s161 = sor.u32 256, 40
    %162 = vbcast.lane.b32.xlu0 %v140, %s161
    %v163 = vpop.permute.xlu0 %162
    %s165 = sor.u32 256, 48
    %166 = vbcast.lane.b32.xlu0 %v140, %s165
    %v167 = vpop.permute.xlu0 %166
    %s169 = sor.u32 256, 56
    %170 = vbcast.lane.b32.xlu0 %v140, %s169
    %v171 = vpop.permute.xlu0 %170
    %v172 = vlaneseq
    %v173 = vshrl.u32 %v172, 7
    %v174 = vsub.s32 1, %v173
    %v175 = vrot.slane %v135, %v174
    %177 = vbcast.lane.b32.xlu0 %v175, 256
    %v178 = vpop.permute.xlu0 %177
    %s180 = sor.u32 256, 8
    %181 = vbcast.lane.b32.xlu0 %v175, %s180
    %v182 = vpop.permute.xlu0 %181
    %s184 = sor.u32 256, 16
    %185 = vbcast.lane.b32.xlu0 %v175, %s184
    %v186 = vpop.permute.xlu0 %185
    %s188 = sor.u32 256, 24
    %189 = vbcast.lane.b32.xlu0 %v175, %s188
    %v190 = vpop.permute.xlu0 %189
    %s192 = sor.u32 256, 32
    %193 = vbcast.lane.b32.xlu0 %v175, %s192
    %v194 = vpop.permute.xlu0 %193
    %s196 = sor.u32 256, 40
    %197 = vbcast.lane.b32.xlu0 %v175, %s196
    %v198 = vpop.permute.xlu0 %197
    %s200 = sor.u32 256, 48
    %201 = vbcast.lane.b32.xlu0 %v175, %s200
    %v202 = vpop.permute.xlu0 %201
    %s204 = sor.u32 256, 56
    %205 = vbcast.lane.b32.xlu0 %v175, %s204
    %v206 = vpop.permute.xlu0 %205
    %v207 = vlaneseq
    %v208 = vshrl.u32 %v207, 7
    %v209 = vsub.s32 2, %v208
    %v210 = vrot.slane %v135, %v209
    %212 = vbcast.lane.b32.xlu0 %v210, 256
    %v213 = vpop.permute.xlu0 %212
    %s215 = sor.u32 256, 8
    %216 = vbcast.lane.b32.xlu0 %v210, %s215
    %v217 = vpop.permute.xlu0 %216
    %s219 = sor.u32 256, 16
    %220 = vbcast.lane.b32.xlu0 %v210, %s219
    %v221 = vpop.permute.xlu0 %220
    %s223 = sor.u32 256, 24
    %224 = vbcast.lane.b32.xlu0 %v210, %s223
    %v225 = vpop.permute.xlu0 %224
    %s227 = sor.u32 256, 32
    %228 = vbcast.lane.b32.xlu0 %v210, %s227
    %v229 = vpop.permute.xlu0 %228
    %s231 = sor.u32 256, 40
    %232 = vbcast.lane.b32.xlu0 %v210, %s231
    %v233 = vpop.permute.xlu0 %232
    %s235 = sor.u32 256, 48
    %236 = vbcast.lane.b32.xlu0 %v210, %s235
    %v237 = vpop.permute.xlu0 %236
    %s239 = sor.u32 256, 56
    %240 = vbcast.lane.b32.xlu0 %v210, %s239
    %v241 = vpop.permute.xlu0 %240
    %v242 = vlaneseq
    %v243 = vshrl.u32 %v242, 7
    %v244 = vsub.s32 3, %v243
    %v245 = vrot.slane %v135, %v244
    %247 = vbcast.lane.b32.xlu0 %v245, 256
    %v248 = vpop.permute.xlu0 %247
    %s250 = sor.u32 256, 8
    %251 = vbcast.lane.b32.xlu0 %v245, %s250
    %v252 = vpop.permute.xlu0 %251
    %s254 = sor.u32 256, 16
    %255 = vbcast.lane.b32.xlu0 %v245, %s254
    %v256 = vpop.permute.xlu0 %255
    %s258 = sor.u32 256, 24
    %259 = vbcast.lane.b32.xlu0 %v245, %s258
    %v260 = vpop.permute.xlu0 %259
    %s262 = sor.u32 256, 32
    %263 = vbcast.lane.b32.xlu0 %v245, %s262
    %v264 = vpop.permute.xlu0 %263
    %s266 = sor.u32 256, 40
    %267 = vbcast.lane.b32.xlu0 %v245, %s266
    %v268 = vpop.permute.xlu0 %267
    %s270 = sor.u32 256, 48
    %271 = vbcast.lane.b32.xlu0 %v245, %s270
    %v272 = vpop.permute.xlu0 %271
    %s274 = sor.u32 256, 56
    %275 = vbcast.lane.b32.xlu0 %v245, %s274
    %v276 = vpop.permute.xlu0 %275
    %v309 = vmul.f32 %v119, %v143
    %v310 = vmul.f32 %v120, %v147
    %v311 = vmul.f32 %v121, %v151
    %v312 = vmul.f32 %v122, %v155
    %v313 = vmul.f32 %v123, %v159
    %v314 = vmul.f32 %v124, %v163
    %v315 = vmul.f32 %v125, %v167
    %v316 = vmul.f32 %v126, %v171
    %v317 = vmul.f32 %v119, %v178
    %v318 = vmul.f32 %v120, %v182
    %v319 = vmul.f32 %v121, %v186
    %v320 = vmul.f32 %v122, %v190
    %v321 = vmul.f32 %v123, %v194
    %v322 = vmul.f32 %v124, %v198
    %v323 = vmul.f32 %v125, %v202
    %v324 = vmul.f32 %v126, %v206
    %v325 = vmul.f32 %v119, %v213
    %v326 = vmul.f32 %v120, %v217
    %v327 = vmul.f32 %v121, %v221
    %v328 = vmul.f32 %v122, %v225
    %v329 = vmul.f32 %v123, %v229
    %v330 = vmul.f32 %v124, %v233
    %v331 = vmul.f32 %v125, %v237
    %v332 = vmul.f32 %v126, %v241
    %v333 = vmul.f32 %v119, %v248
    %v334 = vmul.f32 %v120, %v252
    %v335 = vmul.f32 %v121, %v256
    %v336 = vmul.f32 %v122, %v260
    %v337 = vmul.f32 %v123, %v264
    %v338 = vmul.f32 %v124, %v268
    %v339 = vmul.f32 %v125, %v272
    %v340 = vmul.f32 %v126, %v276
    %v341 = vmul.f32 %v127, %v143
    %v342 = vmul.f32 %v128, %v147
    %v343 = vmul.f32 %v129, %v151
    %v344 = vmul.f32 %v130, %v155
    %v345 = vmul.f32 %v131, %v159
    %v346 = vmul.f32 %v132, %v163
    %v347 = vmul.f32 %v133, %v167
    %v348 = vmul.f32 %v134, %v171
    %v349 = vmul.f32 %v127, %v178
    %v350 = vmul.f32 %v128, %v182
    %v351 = vmul.f32 %v129, %v186
    %v352 = vmul.f32 %v130, %v190
    %v353 = vmul.f32 %v131, %v194
    %v354 = vmul.f32 %v132, %v198
    %v355 = vmul.f32 %v133, %v202
    %v356 = vmul.f32 %v134, %v206
    %v357 = vmul.f32 %v127, %v213
    %v358 = vmul.f32 %v128, %v217
    %v359 = vmul.f32 %v129, %v221
    %v360 = vmul.f32 %v130, %v225
    %v361 = vmul.f32 %v131, %v229
    %v362 = vmul.f32 %v132, %v233
    %v363 = vmul.f32 %v133, %v237
    %v364 = vmul.f32 %v134, %v241
    %v365 = vmul.f32 %v127, %v248
    %v366 = vmul.f32 %v128, %v252
    %v367 = vmul.f32 %v129, %v256
    %v368 = vmul.f32 %v130, %v260
    %v369 = vmul.f32 %v131, %v264
    %v370 = vmul.f32 %v132, %v268
    %v371 = vmul.f32 %v133, %v272
    %v372 = vmul.f32 %v134, %v276
    %437 = vset.pattern.permute.xlu0 0
    %438 = vperm.xlu0 %437, %v309
    %v439 = vpop.permute.xlu0 %438
    %440 = vset.pattern.permute.xlu0 0
    %441 = vperm.xlu0 %440, %v310
    %v442 = vpop.permute.xlu0 %441
    %443 = vset.pattern.permute.xlu0 0
    %444 = vperm.xlu0 %443, %v311
    %v445 = vpop.permute.xlu0 %444
    %446 = vset.pattern.permute.xlu0 0
    %447 = vperm.xlu0 %446, %v312
    %v448 = vpop.permute.xlu0 %447
    %449 = vset.pattern.permute.xlu0 0
    %450 = vperm.xlu0 %449, %v313
    %v451 = vpop.permute.xlu0 %450
    %452 = vset.pattern.permute.xlu0 0
    %453 = vperm.xlu0 %452, %v314
    %v454 = vpop.permute.xlu0 %453
    %455 = vset.pattern.permute.xlu0 0
    %456 = vperm.xlu0 %455, %v315
    %v457 = vpop.permute.xlu0 %456
    %458 = vset.pattern.permute.xlu0 0
    %459 = vperm.xlu0 %458, %v316
    %v460 = vpop.permute.xlu0 %459
    %461 = vset.pattern.permute.xlu0 0
    %462 = vperm.xlu0 %461, %v317
    %v463 = vpop.permute.xlu0 %462
    %464 = vset.pattern.permute.xlu0 0
    %465 = vperm.xlu0 %464, %v318
    %v466 = vpop.permute.xlu0 %465
    %467 = vset.pattern.permute.xlu0 0
    %468 = vperm.xlu0 %467, %v319
    %v469 = vpop.permute.xlu0 %468
    %470 = vset.pattern.permute.xlu0 0
    %471 = vperm.xlu0 %470, %v320
    %v472 = vpop.permute.xlu0 %471
    %473 = vset.pattern.permute.xlu0 0
    %474 = vperm.xlu0 %473, %v321
    %v475 = vpop.permute.xlu0 %474
    %476 = vset.pattern.permute.xlu0 0
    %477 = vperm.xlu0 %476, %v322
    %v478 = vpop.permute.xlu0 %477
    %479 = vset.pattern.permute.xlu0 0
    %480 = vperm.xlu0 %479, %v323
    %v481 = vpop.permute.xlu0 %480
    %482 = vset.pattern.permute.xlu0 0
    %483 = vperm.xlu0 %482, %v324
    %v484 = vpop.permute.xlu0 %483
    %485 = vset.pattern.permute.xlu0 0
    %486 = vperm.xlu0 %485, %v325
    %v487 = vpop.permute.xlu0 %486
    %488 = vset.pattern.permute.xlu0 0
    %489 = vperm.xlu0 %488, %v326
    %v490 = vpop.permute.xlu0 %489
    %491 = vset.pattern.permute.xlu0 0
    %492 = vperm.xlu0 %491, %v327
    %v493 = vpop.permute.xlu0 %492
    %494 = vset.pattern.permute.xlu0 0
    %495 = vperm.xlu0 %494, %v328
    %v496 = vpop.permute.xlu0 %495
    %497 = vset.pattern.permute.xlu0 0
    %498 = vperm.xlu0 %497, %v329
    %v499 = vpop.permute.xlu0 %498
    %500 = vset.pattern.permute.xlu0 0
    %501 = vperm.xlu0 %500, %v330
    %v502 = vpop.permute.xlu0 %501
    %503 = vset.pattern.permute.xlu0 0
    %504 = vperm.xlu0 %503, %v331
    %v505 = vpop.permute.xlu0 %504
    %506 = vset.pattern.permute.xlu0 0
    %507 = vperm.xlu0 %506, %v332
    %v508 = vpop.permute.xlu0 %507
    %509 = vset.pattern.permute.xlu0 0
    %510 = vperm.xlu0 %509, %v333
    %v511 = vpop.permute.xlu0 %510
    %512 = vset.pattern.permute.xlu0 0
    %513 = vperm.xlu0 %512, %v334
    %v514 = vpop.permute.xlu0 %513
    %515 = vset.pattern.permute.xlu0 0
    %516 = vperm.xlu0 %515, %v335
    %v517 = vpop.permute.xlu0 %516
    %518 = vset.pattern.permute.xlu0 0
    %519 = vperm.xlu0 %518, %v336
    %v520 = vpop.permute.xlu0 %519
    %521 = vset.pattern.permute.xlu0 0
    %522 = vperm.xlu0 %521, %v337
    %v523 = vpop.permute.xlu0 %522
    %524 = vset.pattern.permute.xlu0 0
    %525 = vperm.xlu0 %524, %v338
    %v526 = vpop.permute.xlu0 %525
    %527 = vset.pattern.permute.xlu0 0
    %528 = vperm.xlu0 %527, %v339
    %v529 = vpop.permute.xlu0 %528
    %530 = vset.pattern.permute.xlu0 0
    %531 = vperm.xlu0 %530, %v340
    %v532 = vpop.permute.xlu0 %531
    %533 = vset.pattern.permute.xlu0 0
    %534 = vperm.xlu0 %533, %v341
    %v535 = vpop.permute.xlu0 %534
    %536 = vset.pattern.permute.xlu0 0
    %537 = vperm.xlu0 %536, %v342
    %v538 = vpop.permute.xlu0 %537
    %539 = vset.pattern.permute.xlu0 0
    %540 = vperm.xlu0 %539, %v343
    %v541 = vpop.permute.xlu0 %540
    %542 = vset.pattern.permute.xlu0 0
    %543 = vperm.xlu0 %542, %v344
    %v544 = vpop.permute.xlu0 %543
    %545 = vset.pattern.permute.xlu0 0
    %546 = vperm.xlu0 %545, %v345
    %v547 = vpop.permute.xlu0 %546
    %548 = vset.pattern.permute.xlu0 0
    %549 = vperm.xlu0 %548, %v346
    %v550 = vpop.permute.xlu0 %549
    %551 = vset.pattern.permute.xlu0 0
    %552 = vperm.xlu0 %551, %v347
    %v553 = vpop.permute.xlu0 %552
    %554 = vset.pattern.permute.xlu0 0
    %555 = vperm.xlu0 %554, %v348
    %v556 = vpop.permute.xlu0 %555
    %557 = vset.pattern.permute.xlu0 0
    %558 = vperm.xlu0 %557, %v349
    %v559 = vpop.permute.xlu0 %558
    %560 = vset.pattern.permute.xlu0 0
    %561 = vperm.xlu0 %560, %v350
    %v562 = vpop.permute.xlu0 %561
    %563 = vset.pattern.permute.xlu0 0
    %564 = vperm.xlu0 %563, %v351
    %v565 = vpop.permute.xlu0 %564
    %566 = vset.pattern.permute.xlu0 0
    %567 = vperm.xlu0 %566, %v352
    %v568 = vpop.permute.xlu0 %567
    %569 = vset.pattern.permute.xlu0 0
    %570 = vperm.xlu0 %569, %v353
    %v571 = vpop.permute.xlu0 %570
    %572 = vset.pattern.permute.xlu0 0
    %573 = vperm.xlu0 %572, %v354
    %v574 = vpop.permute.xlu0 %573
    %575 = vset.pattern.permute.xlu0 0
    %576 = vperm.xlu0 %575, %v355
    %v577 = vpop.permute.xlu0 %576
    %578 = vset.pattern.permute.xlu0 0
    %579 = vperm.xlu0 %578, %v356
    %v580 = vpop.permute.xlu0 %579
    %581 = vset.pattern.permute.xlu0 0
    %582 = vperm.xlu0 %581, %v357
    %v583 = vpop.permute.xlu0 %582
    %584 = vset.pattern.permute.xlu0 0
    %585 = vperm.xlu0 %584, %v358
    %v586 = vpop.permute.xlu0 %585
    %587 = vset.pattern.permute.xlu0 0
    %588 = vperm.xlu0 %587, %v359
    %v589 = vpop.permute.xlu0 %588
    %590 = vset.pattern.permute.xlu0 0
    %591 = vperm.xlu0 %590, %v360
    %v592 = vpop.permute.xlu0 %591
    %593 = vset.pattern.permute.xlu0 0
    %594 = vperm.xlu0 %593, %v361
    %v595 = vpop.permute.xlu0 %594
    %596 = vset.pattern.permute.xlu0 0
    %597 = vperm.xlu0 %596, %v362
    %v598 = vpop.permute.xlu0 %597
    %599 = vset.pattern.permute.xlu0 0
    %600 = vperm.xlu0 %599, %v363
    %v601 = vpop.permute.xlu0 %600
    %602 = vset.pattern.permute.xlu0 0
    %603 = vperm.xlu0 %602, %v364
    %v604 = vpop.permute.xlu0 %603
    %605 = vset.pattern.permute.xlu0 0
    %606 = vperm.xlu0 %605, %v365
    %v607 = vpop.permute.xlu0 %606
    %608 = vset.pattern.permute.xlu0 0
    %609 = vperm.xlu0 %608, %v366
    %v610 = vpop.permute.xlu0 %609
    %611 = vset.pattern.permute.xlu0 0
    %612 = vperm.xlu0 %611, %v367
    %v613 = vpop.permute.xlu0 %612
    %614 = vset.pattern.permute.xlu0 0
    %615 = vperm.xlu0 %614, %v368
    %v616 = vpop.permute.xlu0 %615
    %617 = vset.pattern.permute.xlu0 0
    %618 = vperm.xlu0 %617, %v369
    %v619 = vpop.permute.xlu0 %618
    %620 = vset.pattern.permute.xlu0 0
    %621 = vperm.xlu0 %620, %v370
    %v622 = vpop.permute.xlu0 %621
    %623 = vset.pattern.permute.xlu0 0
    %624 = vperm.xlu0 %623, %v371
    %v625 = vpop.permute.xlu0 %624
    %626 = vset.pattern.permute.xlu0 0
    %627 = vperm.xlu0 %626, %v372
    %v628 = vpop.permute.xlu0 %627
    %v629 = vlaneseq
    %v630 = vand.u32 %v629, 127
    %v631 = vlaneseq
    %v632 = vshrl.u32 %v631, 7
    %v633 = vsub.s32 %v630, %v632
    %v634 = vrot.slane %v439, %v633
    %v635 = vadd.s32 %v630, 4294967288
    %v636 = vlaneseq
    %v637 = vshrl.u32 %v636, 7
    %v638 = vsub.s32 %v635, %v637
    %v639 = vrot.slane %v442, %v638
    %vm640 = vcmask 130112
    %v641 = vsel %vm640, %v639, %v634
    %v642 = vadd.s32 %v630, 4294967280
    %v643 = vlaneseq
    %v644 = vshrl.u32 %v643, 7
    %v645 = vsub.s32 %v642, %v644
    %v646 = vrot.slane %v445, %v645
    %vm647 = vcmask 195712
    %v648 = vsel %vm647, %v646, %v641
    %v649 = vadd.s32 %v630, 4294967272
    %v650 = vlaneseq
    %v651 = vshrl.u32 %v650, 7
    %v652 = vsub.s32 %v649, %v651
    %v653 = vrot.slane %v448, %v652
    %vm654 = vcmask 261312
    %v655 = vsel %vm654, %v653, %v648
    %v656 = vadd.s32 %v630, 4294967264
    %v657 = vlaneseq
    %v658 = vshrl.u32 %v657, 7
    %v659 = vsub.s32 %v656, %v658
    %v660 = vrot.slane %v451, %v659
    %vm661 = vcmask 326912
    %v662 = vsel %vm661, %v660, %v655
    %v663 = vadd.s32 %v630, 4294967256
    %v664 = vlaneseq
    %v665 = vshrl.u32 %v664, 7
    %v666 = vsub.s32 %v663, %v665
    %v667 = vrot.slane %v454, %v666
    %vm668 = vcmask 392512
    %v669 = vsel %vm668, %v667, %v662
    %v670 = vadd.s32 %v630, 4294967248
    %v671 = vlaneseq
    %v672 = vshrl.u32 %v671, 7
    %v673 = vsub.s32 %v670, %v672
    %v674 = vrot.slane %v457, %v673
    %vm675 = vcmask 458112
    %v676 = vsel %vm675, %v674, %v669
    %v677 = vadd.s32 %v630, 4294967240
    %v678 = vlaneseq
    %v679 = vshrl.u32 %v678, 7
    %v680 = vsub.s32 %v677, %v679
    %v681 = vrot.slane %v460, %v680
    %vm682 = vcmask 523712
    %v683 = vsel %vm682, %v681, %v676
    %v684 = vlaneseq
    %v685 = vshrl.u32 %v684, 7
    %v686 = vsub.s32 %v630, %v685
    %v687 = vrot.slane %v463, %v686
    %v688 = vlaneseq
    %v689 = vshrl.u32 %v688, 7
    %v690 = vsub.s32 %v635, %v689
    %v691 = vrot.slane %v466, %v690
    %v692 = vsel %vm640, %v691, %v687
    %v693 = vlaneseq
    %v694 = vshrl.u32 %v693, 7
    %v695 = vsub.s32 %v642, %v694
    %v696 = vrot.slane %v469, %v695
    %v697 = vsel %vm647, %v696, %v692
    %v698 = vlaneseq
    %v699 = vshrl.u32 %v698, 7
    %v700 = vsub.s32 %v649, %v699
    %v701 = vrot.slane %v472, %v700
    %v702 = vsel %vm654, %v701, %v697
    %v703 = vlaneseq
    %v704 = vshrl.u32 %v703, 7
    %v705 = vsub.s32 %v656, %v704
    %v706 = vrot.slane %v475, %v705
    %v707 = vsel %vm661, %v706, %v702
    %v708 = vlaneseq
    %v709 = vshrl.u32 %v708, 7
    %v710 = vsub.s32 %v663, %v709
    %v711 = vrot.slane %v478, %v710
    %v712 = vsel %vm668, %v711, %v707
    %v713 = vlaneseq
    %v714 = vshrl.u32 %v713, 7
    %v715 = vsub.s32 %v670, %v714
    %v716 = vrot.slane %v481, %v715
    %v717 = vsel %vm675, %v716, %v712
    %v718 = vlaneseq
    %v719 = vshrl.u32 %v718, 7
    %v720 = vsub.s32 %v677, %v719
    %v721 = vrot.slane %v484, %v720
    %v722 = vsel %vm682, %v721, %v717
    %v723 = vlaneseq
    %v724 = vshrl.u32 %v723, 7
    %v725 = vsub.s32 %v630, %v724
    %v726 = vrot.slane %v487, %v725
    %v727 = vlaneseq
    %v728 = vshrl.u32 %v727, 7
    %v729 = vsub.s32 %v635, %v728
    %v730 = vrot.slane %v490, %v729
    %v731 = vsel %vm640, %v730, %v726
    %v732 = vlaneseq
    %v733 = vshrl.u32 %v732, 7
    %v734 = vsub.s32 %v642, %v733
    %v735 = vrot.slane %v493, %v734
    %v736 = vsel %vm647, %v735, %v731
    %v737 = vlaneseq
    %v738 = vshrl.u32 %v737, 7
    %v739 = vsub.s32 %v649, %v738
    %v740 = vrot.slane %v496, %v739
    %v741 = vsel %vm654, %v740, %v736
    %v742 = vlaneseq
    %v743 = vshrl.u32 %v742, 7
    %v744 = vsub.s32 %v656, %v743
    %v745 = vrot.slane %v499, %v744
    %v746 = vsel %vm661, %v745, %v741
    %v747 = vlaneseq
    %v748 = vshrl.u32 %v747, 7
    %v749 = vsub.s32 %v663, %v748
    %v750 = vrot.slane %v502, %v749
    %v751 = vsel %vm668, %v750, %v746
    %v752 = vlaneseq
    %v753 = vshrl.u32 %v752, 7
    %v754 = vsub.s32 %v670, %v753
    %v755 = vrot.slane %v505, %v754
    %v756 = vsel %vm675, %v755, %v751
    %v757 = vlaneseq
    %v758 = vshrl.u32 %v757, 7
    %v759 = vsub.s32 %v677, %v758
    %v760 = vrot.slane %v508, %v759
    %v761 = vsel %vm682, %v760, %v756
    %v762 = vlaneseq
    %v763 = vshrl.u32 %v762, 7
    %v764 = vsub.s32 %v630, %v763
    %v765 = vrot.slane %v511, %v764
    %v766 = vlaneseq
    %v767 = vshrl.u32 %v766, 7
    %v768 = vsub.s32 %v635, %v767
    %v769 = vrot.slane %v514, %v768
    %v770 = vsel %vm640, %v769, %v765
    %v771 = vlaneseq
    %v772 = vshrl.u32 %v771, 7
    %v773 = vsub.s32 %v642, %v772
    %v774 = vrot.slane %v517, %v773
    %v775 = vsel %vm647, %v774, %v770
    %v776 = vlaneseq
    %v777 = vshrl.u32 %v776, 7
    %v778 = vsub.s32 %v649, %v777
    %v779 = vrot.slane %v520, %v778
    %v780 = vsel %vm654, %v779, %v775
    %v781 = vlaneseq
    %v782 = vshrl.u32 %v781, 7
    %v783 = vsub.s32 %v656, %v782
    %v784 = vrot.slane %v523, %v783
    %v785 = vsel %vm661, %v784, %v780
    %v786 = vlaneseq
    %v787 = vshrl.u32 %v786, 7
    %v788 = vsub.s32 %v663, %v787
    %v789 = vrot.slane %v526, %v788
    %v790 = vsel %vm668, %v789, %v785
    %v791 = vlaneseq
    %v792 = vshrl.u32 %v791, 7
    %v793 = vsub.s32 %v670, %v792
    %v794 = vrot.slane %v529, %v793
    %v795 = vsel %vm675, %v794, %v790
    %v796 = vlaneseq
    %v797 = vshrl.u32 %v796, 7
    %v798 = vsub.s32 %v677, %v797
    %v799 = vrot.slane %v532, %v798
    %v800 = vsel %vm682, %v799, %v795
    %v801 = vlaneseq
    %v802 = vshrl.u32 %v801, 7
    %v803 = vsub.s32 %v630, %v802
    %v804 = vrot.slane %v535, %v803
    %v805 = vlaneseq
    %v806 = vshrl.u32 %v805, 7
    %v807 = vsub.s32 %v635, %v806
    %v808 = vrot.slane %v538, %v807
    %v809 = vsel %vm640, %v808, %v804
    %v810 = vlaneseq
    %v811 = vshrl.u32 %v810, 7
    %v812 = vsub.s32 %v642, %v811
    %v813 = vrot.slane %v541, %v812
    %v814 = vsel %vm647, %v813, %v809
    %v815 = vlaneseq
    %v816 = vshrl.u32 %v815, 7
    %v817 = vsub.s32 %v649, %v816
    %v818 = vrot.slane %v544, %v817
    %v819 = vsel %vm654, %v818, %v814
    %v820 = vlaneseq
    %v821 = vshrl.u32 %v820, 7
    %v822 = vsub.s32 %v656, %v821
    %v823 = vrot.slane %v547, %v822
    %v824 = vsel %vm661, %v823, %v819
    %v825 = vlaneseq
    %v826 = vshrl.u32 %v825, 7
    %v827 = vsub.s32 %v663, %v826
    %v828 = vrot.slane %v550, %v827
    %v829 = vsel %vm668, %v828, %v824
    %v830 = vlaneseq
    %v831 = vshrl.u32 %v830, 7
    %v832 = vsub.s32 %v670, %v831
    %v833 = vrot.slane %v553, %v832
    %v834 = vsel %vm675, %v833, %v829
    %v835 = vlaneseq
    %v836 = vshrl.u32 %v835, 7
    %v837 = vsub.s32 %v677, %v836
    %v838 = vrot.slane %v556, %v837
    %v839 = vsel %vm682, %v838, %v834
    %v840 = vlaneseq
    %v841 = vshrl.u32 %v840, 7
    %v842 = vsub.s32 %v630, %v841
    %v843 = vrot.slane %v559, %v842
    %v844 = vlaneseq
    %v845 = vshrl.u32 %v844, 7
    %v846 = vsub.s32 %v635, %v845
    %v847 = vrot.slane %v562, %v846
    %v848 = vsel %vm640, %v847, %v843
    %v849 = vlaneseq
    %v850 = vshrl.u32 %v849, 7
    %v851 = vsub.s32 %v642, %v850
    %v852 = vrot.slane %v565, %v851
    %v853 = vsel %vm647, %v852, %v848
    %v854 = vlaneseq
    %v855 = vshrl.u32 %v854, 7
    %v856 = vsub.s32 %v649, %v855
    %v857 = vrot.slane %v568, %v856
    %v858 = vsel %vm654, %v857, %v853
    %v859 = vlaneseq
    %v860 = vshrl.u32 %v859, 7
    %v861 = vsub.s32 %v656, %v860
    %v862 = vrot.slane %v571, %v861
    %v863 = vsel %vm661, %v862, %v858
    %v864 = vlaneseq
    %v865 = vshrl.u32 %v864, 7
    %v866 = vsub.s32 %v663, %v865
    %v867 = vrot.slane %v574, %v866
    %v868 = vsel %vm668, %v867, %v863
    %v869 = vlaneseq
    %v870 = vshrl.u32 %v869, 7
    %v871 = vsub.s32 %v670, %v870
    %v872 = vrot.slane %v577, %v871
    %v873 = vsel %vm675, %v872, %v868
    %v874 = vlaneseq
    %v875 = vshrl.u32 %v874, 7
    %v876 = vsub.s32 %v677, %v875
    %v877 = vrot.slane %v580, %v876
    %v878 = vsel %vm682, %v877, %v873
    %v879 = vlaneseq
    %v880 = vshrl.u32 %v879, 7
    %v881 = vsub.s32 %v630, %v880
    %v882 = vrot.slane %v583, %v881
    %v883 = vlaneseq
    %v884 = vshrl.u32 %v883, 7
    %v885 = vsub.s32 %v635, %v884
    %v886 = vrot.slane %v586, %v885
    %v887 = vsel %vm640, %v886, %v882
    %v888 = vlaneseq
    %v889 = vshrl.u32 %v888, 7
    %v890 = vsub.s32 %v642, %v889
    %v891 = vrot.slane %v589, %v890
    %v892 = vsel %vm647, %v891, %v887
    %v893 = vlaneseq
    %v894 = vshrl.u32 %v893, 7
    %v895 = vsub.s32 %v649, %v894
    %v896 = vrot.slane %v592, %v895
    %v897 = vsel %vm654, %v896, %v892
    %v898 = vlaneseq
    %v899 = vshrl.u32 %v898, 7
    %v900 = vsub.s32 %v656, %v899
    %v901 = vrot.slane %v595, %v900
    %v902 = vsel %vm661, %v901, %v897
    %v903 = vlaneseq
    %v904 = vshrl.u32 %v903, 7
    %v905 = vsub.s32 %v663, %v904
    %v906 = vrot.slane %v598, %v905
    %v907 = vsel %vm668, %v906, %v902
    %v908 = vlaneseq
    %v909 = vshrl.u32 %v908, 7
    %v910 = vsub.s32 %v670, %v909
    %v911 = vrot.slane %v601, %v910
    %v912 = vsel %vm675, %v911, %v907
    %v913 = vlaneseq
    %v914 = vshrl.u32 %v913, 7
    %v915 = vsub.s32 %v677, %v914
    %v916 = vrot.slane %v604, %v915
    %v917 = vsel %vm682, %v916, %v912
    %v918 = vlaneseq
    %v919 = vshrl.u32 %v918, 7
    %v920 = vsub.s32 %v630, %v919
    %v921 = vrot.slane %v607, %v920
    %v922 = vlaneseq
    %v923 = vshrl.u32 %v922, 7
    %v924 = vsub.s32 %v635, %v923
    %v925 = vrot.slane %v610, %v924
    %v926 = vsel %vm640, %v925, %v921
    %v927 = vlaneseq
    %v928 = vshrl.u32 %v927, 7
    %v929 = vsub.s32 %v642, %v928
    %v930 = vrot.slane %v613, %v929
    %v931 = vsel %vm647, %v930, %v926
    %v932 = vlaneseq
    %v933 = vshrl.u32 %v932, 7
    %v934 = vsub.s32 %v649, %v933
    %v935 = vrot.slane %v616, %v934
    %v936 = vsel %vm654, %v935, %v931
    %v937 = vlaneseq
    %v938 = vshrl.u32 %v937, 7
    %v939 = vsub.s32 %v656, %v938
    %v940 = vrot.slane %v619, %v939
    %v941 = vsel %vm661, %v940, %v936
    %v942 = vlaneseq
    %v943 = vshrl.u32 %v942, 7
    %v944 = vsub.s32 %v663, %v943
    %v945 = vrot.slane %v622, %v944
    %v946 = vsel %vm668, %v945, %v941
    %v947 = vlaneseq
    %v948 = vshrl.u32 %v947, 7
    %v949 = vsub.s32 %v670, %v948
    %v950 = vrot.slane %v625, %v949
    %v951 = vsel %vm675, %v950, %v946
    %v952 = vlaneseq
    %v953 = vshrl.u32 %v952, 7
    %v954 = vsub.s32 %v677, %v953
    %v955 = vrot.slane %v628, %v954
    %v956 = vsel %vm682, %v955, %v951
    %vm957 = vcmask 1041409
    %v958 = vsel %vm957, %v722, %v683
    %vm959 = vcmask 1042434
    %v960 = vsel %vm959, %v761, %v958
    %vm961 = vcmask 1043459
    %v962 = vsel %vm961, %v800, %v960
    %v963 = vsel %vm957, %v878, %v839
    %v964 = vsel %vm959, %v917, %v963
    %v965 = vsel %vm961, %v956, %v964
    %vm968 = vcmask 519168
    %v969 = vsel %vm968, %v962, 0.0
    %970 = vadd.xlane.f32.xlu0 %v969
    %v971 = vpop.xlane.xlu0 %970
    %v972 = vsel %vm968, %v965, 0.0
    %973 = vadd.xlane.f32.xlu0 %v972
    %v974 = vpop.xlane.xlu0 %973
    %v975 = vld [vmem:[%s2] sm:$0x1]
    %v977 = vlaneseq
    %v978 = vshrl.u32 %v977, 7
    %v979 = vsub.s32 0, %v978
    %v980 = vrot.slane %v975, %v979
    %982 = vbcast.lane.b32.xlu0 %v980, 256
    %v983 = vpop.permute.xlu0 %982
    %v985 = vadd.f32 %v971, %v983
    %v986 = vadd.f32 %v974, %v983
    %s987 = sld [smem:[#allocation2]]
    %vm988 = vcmp.ge.f32.partialorder %v985, 0.0
    %vm989 = vcmp.ge.f32.partialorder %v986, 0.0
    %v990 = vstv %s987
    %v991 = vmul.f32 %v990, %v985
    %v992 = vmul.f32 %v990, %v986
    %v993 = vsel %vm988, %v985, %v991
    %v994 = vsel %vm989, %v986, %v992
    %v995 = vld [vmem:[%s3] sm:$0xff]
    %v996 = vld [vmem:[%s3 + $0x8] sm:$0xff]
    %v997 = vld [vmem:[%s3 + $0x10] sm:$0xff]
    %v998 = vld [vmem:[%s3 + $0x18] sm:$0xff]
    %v999 = vld [vmem:[%s3 + $0x20] sm:$0xff]
    %v1000 = vld [vmem:[%s3 + $0x28] sm:$0xff]
    %v1001 = vld [vmem:[%s3 + $0x30] sm:$0xff]
    %v1002 = vld [vmem:[%s3 + $0x38] sm:$0xff]
    %v1011 = vlaneseq
    %v1012 = vshrl.u32 %v1011, 7
    %v1013 = vsub.s32 0, %v1012
    %v1014 = vrot.slane %v995, %v1013
    %1016 = vbcast.lane.b32.xlu0 %v1014, 256
    %v1017 = vpop.permute.xlu0 %1016
    %v1018 = vlaneseq
    %v1019 = vshrl.u32 %v1018, 7
    %v1020 = vsub.s32 1, %v1019
    %v1021 = vrot.slane %v995, %v1020
    %1023 = vbcast.lane.b32.xlu0 %v1021, 256
    %v1024 = vpop.permute.xlu0 %1023
    %v1025 = vlaneseq
    %v1026 = vshrl.u32 %v1025, 7
    %v1027 = vsub.s32 2, %v1026
    %v1028 = vrot.slane %v995, %v1027
    %1030 = vbcast.lane.b32.xlu0 %v1028, 256
    %v1031 = vpop.permute.xlu0 %1030
    %v1032 = vlaneseq
    %v1033 = vshrl.u32 %v1032, 7
    %v1034 = vsub.s32 3, %v1033
    %v1035 = vrot.slane %v995, %v1034
    %1037 = vbcast.lane.b32.xlu0 %v1035, 256
    %v1038 = vpop.permute.xlu0 %1037
    %v1039 = vlaneseq
    %v1040 = vshrl.u32 %v1039, 7
    %v1041 = vsub.s32 4, %v1040
    %v1042 = vrot.slane %v995, %v1041
    %1044 = vbcast.lane.b32.xlu0 %v1042, 256
    %v1045 = vpop.permute.xlu0 %1044
    %v1046 = vlaneseq
    %v1047 = vshrl.u32 %v1046, 7
    %v1048 = vsub.s32 5, %v1047
    %v1049 = vrot.slane %v995, %v1048
    %1051 = vbcast.lane.b32.xlu0 %v1049, 256
    %v1052 = vpop.permute.xlu0 %1051
    %v1053 = vlaneseq
    %v1054 = vshrl.u32 %v1053, 7
    %v1055 = vsub.s32 6, %v1054
    %v1056 = vrot.slane %v995, %v1055
    %1058 = vbcast.lane.b32.xlu0 %v1056, 256
    %v1059 = vpop.permute.xlu0 %1058
    %v1060 = vlaneseq
    %v1061 = vshrl.u32 %v1060, 7
    %v1062 = vsub.s32 7, %v1061
    %v1063 = vrot.slane %v995, %v1062
    %1065 = vbcast.lane.b32.xlu0 %v1063, 256
    %v1066 = vpop.permute.xlu0 %1065
    %v1067 = vlaneseq
    %v1068 = vshrl.u32 %v1067, 7
    %v1069 = vsub.s32 0, %v1068
    %v1070 = vrot.slane %v996, %v1069
    %1072 = vbcast.lane.b32.xlu0 %v1070, 256
    %v1073 = vpop.permute.xlu0 %1072
    %v1074 = vlaneseq
    %v1075 = vshrl.u32 %v1074, 7
    %v1076 = vsub.s32 1, %v1075
    %v1077 = vrot.slane %v996, %v1076
    %1079 = vbcast.lane.b32.xlu0 %v1077, 256
    %v1080 = vpop.permute.xlu0 %1079
    %v1081 = vlaneseq
    %v1082 = vshrl.u32 %v1081, 7
    %v1083 = vsub.s32 2, %v1082
    %v1084 = vrot.slane %v996, %v1083
    %1086 = vbcast.lane.b32.xlu0 %v1084, 256
    %v1087 = vpop.permute.xlu0 %1086
    %v1088 = vlaneseq
    %v1089 = vshrl.u32 %v1088, 7
    %v1090 = vsub.s32 3, %v1089
    %v1091 = vrot.slane %v996, %v1090
    %1093 = vbcast.lane.b32.xlu0 %v1091, 256
    %v1094 = vpop.permute.xlu0 %1093
    %v1095 = vlaneseq
    %v1096 = vshrl.u32 %v1095, 7
    %v1097 = vsub.s32 4, %v1096
    %v1098 = vrot.slane %v996, %v1097
    %1100 = vbcast.lane.b32.xlu0 %v1098, 256
    %v1101 = vpop.permute.xlu0 %1100
    %v1102 = vlaneseq
    %v1103 = vshrl.u32 %v1102, 7
    %v1104 = vsub.s32 5, %v1103
    %v1105 = vrot.slane %v996, %v1104
    %1107 = vbcast.lane.b32.xlu0 %v1105, 256
    %v1108 = vpop.permute.xlu0 %1107
    %v1109 = vlaneseq
    %v1110 = vshrl.u32 %v1109, 7
    %v1111 = vsub.s32 6, %v1110
    %v1112 = vrot.slane %v996, %v1111
    %1114 = vbcast.lane.b32.xlu0 %v1112, 256
    %v1115 = vpop.permute.xlu0 %1114
    %v1116 = vlaneseq
    %v1117 = vshrl.u32 %v1116, 7
    %v1118 = vsub.s32 7, %v1117
    %v1119 = vrot.slane %v996, %v1118
    %1121 = vbcast.lane.b32.xlu0 %v1119, 256
    %v1122 = vpop.permute.xlu0 %1121
    %v1123 = vlaneseq
    %v1124 = vshrl.u32 %v1123, 7
    %v1125 = vsub.s32 0, %v1124
    %v1126 = vrot.slane %v997, %v1125
    %1128 = vbcast.lane.b32.xlu0 %v1126, 256
    %v1129 = vpop.permute.xlu0 %1128
    %v1130 = vlaneseq
    %v1131 = vshrl.u32 %v1130, 7
    %v1132 = vsub.s32 1, %v1131
    %v1133 = vrot.slane %v997, %v1132
    %1135 = vbcast.lane.b32.xlu0 %v1133, 256
    %v1136 = vpop.permute.xlu0 %1135
    %v1137 = vlaneseq
    %v1138 = vshrl.u32 %v1137, 7
    %v1139 = vsub.s32 2, %v1138
    %v1140 = vrot.slane %v997, %v1139
    %1142 = vbcast.lane.b32.xlu0 %v1140, 256
    %v1143 = vpop.permute.xlu0 %1142
    %v1144 = vlaneseq
    %v1145 = vshrl.u32 %v1144, 7
    %v1146 = vsub.s32 3, %v1145
    %v1147 = vrot.slane %v997, %v1146
    %1149 = vbcast.lane.b32.xlu0 %v1147, 256
    %v1150 = vpop.permute.xlu0 %1149
    %v1151 = vlaneseq
    %v1152 = vshrl.u32 %v1151, 7
    %v1153 = vsub.s32 4, %v1152
    %v1154 = vrot.slane %v997, %v1153
    %1156 = vbcast.lane.b32.xlu0 %v1154, 256
    %v1157 = vpop.permute.xlu0 %1156
    %v1158 = vlaneseq
    %v1159 = vshrl.u32 %v1158, 7
    %v1160 = vsub.s32 5, %v1159
    %v1161 = vrot.slane %v997, %v1160
    %1163 = vbcast.lane.b32.xlu0 %v1161, 256
    %v1164 = vpop.permute.xlu0 %1163
    %v1165 = vlaneseq
    %v1166 = vshrl.u32 %v1165, 7
    %v1167 = vsub.s32 6, %v1166
    %v1168 = vrot.slane %v997, %v1167
    %1170 = vbcast.lane.b32.xlu0 %v1168, 256
    %v1171 = vpop.permute.xlu0 %1170
    %v1172 = vlaneseq
    %v1173 = vshrl.u32 %v1172, 7
    %v1174 = vsub.s32 7, %v1173
    %v1175 = vrot.slane %v997, %v1174
    %1177 = vbcast.lane.b32.xlu0 %v1175, 256
    %v1178 = vpop.permute.xlu0 %1177
    %v1179 = vlaneseq
    %v1180 = vshrl.u32 %v1179, 7
    %v1181 = vsub.s32 0, %v1180
    %v1182 = vrot.slane %v998, %v1181
    %1184 = vbcast.lane.b32.xlu0 %v1182, 256
    %v1185 = vpop.permute.xlu0 %1184
    %v1186 = vlaneseq
    %v1187 = vshrl.u32 %v1186, 7
    %v1188 = vsub.s32 1, %v1187
    %v1189 = vrot.slane %v998, %v1188
    %1191 = vbcast.lane.b32.xlu0 %v1189, 256
    %v1192 = vpop.permute.xlu0 %1191
    %v1193 = vlaneseq
    %v1194 = vshrl.u32 %v1193, 7
    %v1195 = vsub.s32 2, %v1194
    %v1196 = vrot.slane %v998, %v1195
    %1198 = vbcast.lane.b32.xlu0 %v1196, 256
    %v1199 = vpop.permute.xlu0 %1198
    %v1200 = vlaneseq
    %v1201 = vshrl.u32 %v1200, 7
    %v1202 = vsub.s32 3, %v1201
    %v1203 = vrot.slane %v998, %v1202
    %1205 = vbcast.lane.b32.xlu0 %v1203, 256
    %v1206 = vpop.permute.xlu0 %1205
    %v1207 = vlaneseq
    %v1208 = vshrl.u32 %v1207, 7
    %v1209 = vsub.s32 4, %v1208
    %v1210 = vrot.slane %v998, %v1209
    %1212 = vbcast.lane.b32.xlu0 %v1210, 256
    %v1213 = vpop.permute.xlu0 %1212
    %v1214 = vlaneseq
    %v1215 = vshrl.u32 %v1214, 7
    %v1216 = vsub.s32 5, %v1215
    %v1217 = vrot.slane %v998, %v1216
    %1219 = vbcast.lane.b32.xlu0 %v1217, 256
    %v1220 = vpop.permute.xlu0 %1219
    %v1221 = vlaneseq
    %v1222 = vshrl.u32 %v1221, 7
    %v1223 = vsub.s32 6, %v1222
    %v1224 = vrot.slane %v998, %v1223
    %1226 = vbcast.lane.b32.xlu0 %v1224, 256
    %v1227 = vpop.permute.xlu0 %1226
    %v1228 = vlaneseq
    %v1229 = vshrl.u32 %v1228, 7
    %v1230 = vsub.s32 7, %v1229
    %v1231 = vrot.slane %v998, %v1230
    %1233 = vbcast.lane.b32.xlu0 %v1231, 256
    %v1234 = vpop.permute.xlu0 %1233
    %v1235 = vlaneseq
    %v1236 = vshrl.u32 %v1235, 7
    %v1237 = vsub.s32 0, %v1236
    %v1238 = vrot.slane %v999, %v1237
    %1240 = vbcast.lane.b32.xlu0 %v1238, 256
    %v1241 = vpop.permute.xlu0 %1240
    %v1242 = vlaneseq
    %v1243 = vshrl.u32 %v1242, 7
    %v1244 = vsub.s32 1, %v1243
    %v1245 = vrot.slane %v999, %v1244
    %1247 = vbcast.lane.b32.xlu0 %v1245, 256
    %v1248 = vpop.permute.xlu0 %1247
    %v1249 = vlaneseq
    %v1250 = vshrl.u32 %v1249, 7
    %v1251 = vsub.s32 2, %v1250
    %v1252 = vrot.slane %v999, %v1251
    %1254 = vbcast.lane.b32.xlu0 %v1252, 256
    %v1255 = vpop.permute.xlu0 %1254
    %v1256 = vlaneseq
    %v1257 = vshrl.u32 %v1256, 7
    %v1258 = vsub.s32 3, %v1257
    %v1259 = vrot.slane %v999, %v1258
    %1261 = vbcast.lane.b32.xlu0 %v1259, 256
    %v1262 = vpop.permute.xlu0 %1261
    %v1263 = vlaneseq
    %v1264 = vshrl.u32 %v1263, 7
    %v1265 = vsub.s32 4, %v1264
    %v1266 = vrot.slane %v999, %v1265
    %1268 = vbcast.lane.b32.xlu0 %v1266, 256
    %v1269 = vpop.permute.xlu0 %1268
    %v1270 = vlaneseq
    %v1271 = vshrl.u32 %v1270, 7
    %v1272 = vsub.s32 5, %v1271
    %v1273 = vrot.slane %v999, %v1272
    %1275 = vbcast.lane.b32.xlu0 %v1273, 256
    %v1276 = vpop.permute.xlu0 %1275
    %v1277 = vlaneseq
    %v1278 = vshrl.u32 %v1277, 7
    %v1279 = vsub.s32 6, %v1278
    %v1280 = vrot.slane %v999, %v1279
    %1282 = vbcast.lane.b32.xlu0 %v1280, 256
    %v1283 = vpop.permute.xlu0 %1282
    %v1284 = vlaneseq
    %v1285 = vshrl.u32 %v1284, 7
    %v1286 = vsub.s32 7, %v1285
    %v1287 = vrot.slane %v999, %v1286
    %1289 = vbcast.lane.b32.xlu0 %v1287, 256
    %v1290 = vpop.permute.xlu0 %1289
    %v1291 = vlaneseq
    %v1292 = vshrl.u32 %v1291, 7
    %v1293 = vsub.s32 0, %v1292
    %v1294 = vrot.slane %v1000, %v1293
    %1296 = vbcast.lane.b32.xlu0 %v1294, 256
    %v1297 = vpop.permute.xlu0 %1296
    %v1298 = vlaneseq
    %v1299 = vshrl.u32 %v1298, 7
    %v1300 = vsub.s32 1, %v1299
    %v1301 = vrot.slane %v1000, %v1300
    %1303 = vbcast.lane.b32.xlu0 %v1301, 256
    %v1304 = vpop.permute.xlu0 %1303
    %v1305 = vlaneseq
    %v1306 = vshrl.u32 %v1305, 7
    %v1307 = vsub.s32 2, %v1306
    %v1308 = vrot.slane %v1000, %v1307
    %1310 = vbcast.lane.b32.xlu0 %v1308, 256
    %v1311 = vpop.permute.xlu0 %1310
    %v1312 = vlaneseq
    %v1313 = vshrl.u32 %v1312, 7
    %v1314 = vsub.s32 3, %v1313
    %v1315 = vrot.slane %v1000, %v1314
    %1317 = vbcast.lane.b32.xlu0 %v1315, 256
    %v1318 = vpop.permute.xlu0 %1317
    %v1319 = vlaneseq
    %v1320 = vshrl.u32 %v1319, 7
    %v1321 = vsub.s32 4, %v1320
    %v1322 = vrot.slane %v1000, %v1321
    %1324 = vbcast.lane.b32.xlu0 %v1322, 256
    %v1325 = vpop.permute.xlu0 %1324
    %v1326 = vlaneseq
    %v1327 = vshrl.u32 %v1326, 7
    %v1328 = vsub.s32 5, %v1327
    %v1329 = vrot.slane %v1000, %v1328
    %1331 = vbcast.lane.b32.xlu0 %v1329, 256
    %v1332 = vpop.permute.xlu0 %1331
    %v1333 = vlaneseq
    %v1334 = vshrl.u32 %v1333, 7
    %v1335 = vsub.s32 6, %v1334
    %v1336 = vrot.slane %v1000, %v1335
    %1338 = vbcast.lane.b32.xlu0 %v1336, 256
    %v1339 = vpop.permute.xlu0 %1338
    %v1340 = vlaneseq
    %v1341 = vshrl.u32 %v1340, 7
    %v1342 = vsub.s32 7, %v1341
    %v1343 = vrot.slane %v1000, %v1342
    %1345 = vbcast.lane.b32.xlu0 %v1343, 256
    %v1346 = vpop.permute.xlu0 %1345
    %v1347 = vlaneseq
    %v1348 = vshrl.u32 %v1347, 7
    %v1349 = vsub.s32 0, %v1348
    %v1350 = vrot.slane %v1001, %v1349
    %1352 = vbcast.lane.b32.xlu0 %v1350, 256
    %v1353 = vpop.permute.xlu0 %1352
    %v1354 = vlaneseq
    %v1355 = vshrl.u32 %v1354, 7
    %v1356 = vsub.s32 1, %v1355
    %v1357 = vrot.slane %v1001, %v1356
    %1359 = vbcast.lane.b32.xlu0 %v1357, 256
    %v1360 = vpop.permute.xlu0 %1359
    %v1361 = vlaneseq
    %v1362 = vshrl.u32 %v1361, 7
    %v1363 = vsub.s32 2, %v1362
    %v1364 = vrot.slane %v1001, %v1363
    %1366 = vbcast.lane.b32.xlu0 %v1364, 256
    %v1367 = vpop.permute.xlu0 %1366
    %v1368 = vlaneseq
    %v1369 = vshrl.u32 %v1368, 7
    %v1370 = vsub.s32 3, %v1369
    %v1371 = vrot.slane %v1001, %v1370
    %1373 = vbcast.lane.b32.xlu0 %v1371, 256
    %v1374 = vpop.permute.xlu0 %1373
    %v1375 = vlaneseq
    %v1376 = vshrl.u32 %v1375, 7
    %v1377 = vsub.s32 4, %v1376
    %v1378 = vrot.slane %v1001, %v1377
    %1380 = vbcast.lane.b32.xlu0 %v1378, 256
    %v1381 = vpop.permute.xlu0 %1380
    %v1382 = vlaneseq
    %v1383 = vshrl.u32 %v1382, 7
    %v1384 = vsub.s32 5, %v1383
    %v1385 = vrot.slane %v1001, %v1384
    %1387 = vbcast.lane.b32.xlu0 %v1385, 256
    %v1388 = vpop.permute.xlu0 %1387
    %v1389 = vlaneseq
    %v1390 = vshrl.u32 %v1389, 7
    %v1391 = vsub.s32 6, %v1390
    %v1392 = vrot.slane %v1001, %v1391
    %1394 = vbcast.lane.b32.xlu0 %v1392, 256
    %v1395 = vpop.permute.xlu0 %1394
    %v1396 = vlaneseq
    %v1397 = vshrl.u32 %v1396, 7
    %v1398 = vsub.s32 7, %v1397
    %v1399 = vrot.slane %v1001, %v1398
    %1401 = vbcast.lane.b32.xlu0 %v1399, 256
    %v1402 = vpop.permute.xlu0 %1401
    %v1403 = vlaneseq
    %v1404 = vshrl.u32 %v1403, 7
    %v1405 = vsub.s32 0, %v1404
    %v1406 = vrot.slane %v1002, %v1405
    %1408 = vbcast.lane.b32.xlu0 %v1406, 256
    %v1409 = vpop.permute.xlu0 %1408
    %v1410 = vlaneseq
    %v1411 = vshrl.u32 %v1410, 7
    %v1412 = vsub.s32 1, %v1411
    %v1413 = vrot.slane %v1002, %v1412
    %1415 = vbcast.lane.b32.xlu0 %v1413, 256
    %v1416 = vpop.permute.xlu0 %1415
    %v1417 = vlaneseq
    %v1418 = vshrl.u32 %v1417, 7
    %v1419 = vsub.s32 2, %v1418
    %v1420 = vrot.slane %v1002, %v1419
    %1422 = vbcast.lane.b32.xlu0 %v1420, 256
    %v1423 = vpop.permute.xlu0 %1422
    %v1424 = vlaneseq
    %v1425 = vshrl.u32 %v1424, 7
    %v1426 = vsub.s32 3, %v1425
    %v1427 = vrot.slane %v1002, %v1426
    %1429 = vbcast.lane.b32.xlu0 %v1427, 256
    %v1430 = vpop.permute.xlu0 %1429
    %v1431 = vlaneseq
    %v1432 = vshrl.u32 %v1431, 7
    %v1433 = vsub.s32 4, %v1432
    %v1434 = vrot.slane %v1002, %v1433
    %1436 = vbcast.lane.b32.xlu0 %v1434, 256
    %v1437 = vpop.permute.xlu0 %1436
    %v1438 = vlaneseq
    %v1439 = vshrl.u32 %v1438, 7
    %v1440 = vsub.s32 5, %v1439
    %v1441 = vrot.slane %v1002, %v1440
    %1443 = vbcast.lane.b32.xlu0 %v1441, 256
    %v1444 = vpop.permute.xlu0 %1443
    %v1445 = vlaneseq
    %v1446 = vshrl.u32 %v1445, 7
    %v1447 = vsub.s32 6, %v1446
    %v1448 = vrot.slane %v1002, %v1447
    %1450 = vbcast.lane.b32.xlu0 %v1448, 256
    %v1451 = vpop.permute.xlu0 %1450
    %v1452 = vlaneseq
    %v1453 = vshrl.u32 %v1452, 7
    %v1454 = vsub.s32 7, %v1453
    %v1455 = vrot.slane %v1002, %v1454
    %1457 = vbcast.lane.b32.xlu0 %v1455, 256
    %v1458 = vpop.permute.xlu0 %1457
    %v1523 = vmul.f32 %v993, %v1017
    %v1524 = vmul.f32 %v993, %v1024
    %v1525 = vmul.f32 %v993, %v1031
    %v1526 = vmul.f32 %v993, %v1038
    %v1527 = vmul.f32 %v993, %v1045
    %v1528 = vmul.f32 %v993, %v1052
    %v1529 = vmul.f32 %v993, %v1059
    %v1530 = vmul.f32 %v993, %v1066
    %v1531 = vmul.f32 %v993, %v1073
    %v1532 = vmul.f32 %v993, %v1080
    %v1533 = vmul.f32 %v993, %v1087
    %v1534 = vmul.f32 %v993, %v1094
    %v1535 = vmul.f32 %v993, %v1101
    %v1536 = vmul.f32 %v993, %v1108
    %v1537 = vmul.f32 %v993, %v1115
    %v1538 = vmul.f32 %v993, %v1122
    %v1539 = vmul.f32 %v993, %v1129
    %v1540 = vmul.f32 %v993, %v1136
    %v1541 = vmul.f32 %v993, %v1143
    %v1542 = vmul.f32 %v993, %v1150
    %v1543 = vmul.f32 %v993, %v1157
    %v1544 = vmul.f32 %v993, %v1164
    %v1545 = vmul.f32 %v993, %v1171
    %v1546 = vmul.f32 %v993, %v1178
    %v1547 = vmul.f32 %v993, %v1185
    %v1548 = vmul.f32 %v993, %v1192
    %v1549 = vmul.f32 %v993, %v1199
    %v1550 = vmul.f32 %v993, %v1206
    %v1551 = vmul.f32 %v993, %v1213
    %v1552 = vmul.f32 %v993, %v1220
    %v1553 = vmul.f32 %v993, %v1227
    %v1554 = vmul.f32 %v993, %v1234
    %v1555 = vmul.f32 %v993, %v1241
    %v1556 = vmul.f32 %v993, %v1248
    %v1557 = vmul.f32 %v993, %v1255
    %v1558 = vmul.f32 %v993, %v1262
    %v1559 = vmul.f32 %v993, %v1269
    %v1560 = vmul.f32 %v993, %v1276
    %v1561 = vmul.f32 %v993, %v1283
    %v1562 = vmul.f32 %v993, %v1290
    %v1563 = vmul.f32 %v993, %v1297
    %v1564 = vmul.f32 %v993, %v1304
    %v1565 = vmul.f32 %v993, %v1311
    %v1566 = vmul.f32 %v993, %v1318
    %v1567 = vmul.f32 %v993, %v1325
    %v1568 = vmul.f32 %v993, %v1332
    %v1569 = vmul.f32 %v993, %v1339
    %v1570 = vmul.f32 %v993, %v1346
    %v1571 = vmul.f32 %v993, %v1353
    %v1572 = vmul.f32 %v993, %v1360
    %v1573 = vmul.f32 %v993, %v1367
    %v1574 = vmul.f32 %v993, %v1374
    %v1575 = vmul.f32 %v993, %v1381
    %v1576 = vmul.f32 %v993, %v1388
    %v1577 = vmul.f32 %v993, %v1395
    %v1578 = vmul.f32 %v993, %v1402
    %v1579 = vmul.f32 %v993, %v1409
    %v1580 = vmul.f32 %v993, %v1416
    %v1581 = vmul.f32 %v993, %v1423
    %v1582 = vmul.f32 %v993, %v1430
    %v1583 = vmul.f32 %v993, %v1437
    %v1584 = vmul.f32 %v993, %v1444
    %v1585 = vmul.f32 %v993, %v1451
    %v1586 = vmul.f32 %v993, %v1458
    %v1587 = vmul.f32 %v994, %v1017
    %v1588 = vmul.f32 %v994, %v1024
    %v1589 = vmul.f32 %v994, %v1031
    %v1590 = vmul.f32 %v994, %v1038
    %v1591 = vmul.f32 %v994, %v1045
    %v1592 = vmul.f32 %v994, %v1052
    %v1593 = vmul.f32 %v994, %v1059
    %v1594 = vmul.f32 %v994, %v1066
    %v1595 = vmul.f32 %v994, %v1073
    %v1596 = vmul.f32 %v994, %v1080
    %v1597 = vmul.f32 %v994, %v1087
    %v1598 = vmul.f32 %v994, %v1094
    %v1599 = vmul.f32 %v994, %v1101
    %v1600 = vmul.f32 %v994, %v1108
    %v1601 = vmul.f32 %v994, %v1115
    %v1602 = vmul.f32 %v994, %v1122
    %v1603 = vmul.f32 %v994, %v1129
    %v1604 = vmul.f32 %v994, %v1136
    %v1605 = vmul.f32 %v994, %v1143
    %v1606 = vmul.f32 %v994, %v1150
    %v1607 = vmul.f32 %v994, %v1157
    %v1608 = vmul.f32 %v994, %v1164
    %v1609 = vmul.f32 %v994, %v1171
    %v1610 = vmul.f32 %v994, %v1178
    %v1611 = vmul.f32 %v994, %v1185
    %v1612 = vmul.f32 %v994, %v1192
    %v1613 = vmul.f32 %v994, %v1199
    %v1614 = vmul.f32 %v994, %v1206
    %v1615 = vmul.f32 %v994, %v1213
    %v1616 = vmul.f32 %v994, %v1220
    %v1617 = vmul.f32 %v994, %v1227
    %v1618 = vmul.f32 %v994, %v1234
    %v1619 = vmul.f32 %v994, %v1241
    %v1620 = vmul.f32 %v994, %v1248
    %v1621 = vmul.f32 %v994, %v1255
    %v1622 = vmul.f32 %v994, %v1262
    %v1623 = vmul.f32 %v994, %v1269
    %v1624 = vmul.f32 %v994, %v1276
    %v1625 = vmul.f32 %v994, %v1283
    %v1626 = vmul.f32 %v994, %v1290
    %v1627 = vmul.f32 %v994, %v1297
    %v1628 = vmul.f32 %v994, %v1304
    %v1629 = vmul.f32 %v994, %v1311
    %v1630 = vmul.f32 %v994, %v1318
    %v1631 = vmul.f32 %v994, %v1325
    %v1632 = vmul.f32 %v994, %v1332
    %v1633 = vmul.f32 %v994, %v1339
    %v1634 = vmul.f32 %v994, %v1346
    %v1635 = vmul.f32 %v994, %v1353
    %v1636 = vmul.f32 %v994, %v1360
    %v1637 = vmul.f32 %v994, %v1367
    %v1638 = vmul.f32 %v994, %v1374
    %v1639 = vmul.f32 %v994, %v1381
    %v1640 = vmul.f32 %v994, %v1388
    %v1641 = vmul.f32 %v994, %v1395
    %v1642 = vmul.f32 %v994, %v1402
    %v1643 = vmul.f32 %v994, %v1409
    %v1644 = vmul.f32 %v994, %v1416
    %v1645 = vmul.f32 %v994, %v1423
    %v1646 = vmul.f32 %v994, %v1430
    %v1647 = vmul.f32 %v994, %v1437
    %v1648 = vmul.f32 %v994, %v1444
    %v1649 = vmul.f32 %v994, %v1451
    %v1650 = vmul.f32 %v994, %v1458
    %1779 = vset.pattern.permute.xlu0 0
    %1780 = vperm.xlu0 %1779, %v1523
    %v1781 = vpop.permute.xlu0 %1780
    %1782 = vset.pattern.permute.xlu0 0
    %1783 = vperm.xlu0 %1782, %v1524
    %v1784 = vpop.permute.xlu0 %1783
    %1785 = vset.pattern.permute.xlu0 0
    %1786 = vperm.xlu0 %1785, %v1525
    %v1787 = vpop.permute.xlu0 %1786
    %1788 = vset.pattern.permute.xlu0 0
    %1789 = vperm.xlu0 %1788, %v1526
    %v1790 = vpop.permute.xlu0 %1789
    %1791 = vset.pattern.permute.xlu0 0
    %1792 = vperm.xlu0 %1791, %v1527
    %v1793 = vpop.permute.xlu0 %1792
    %1794 = vset.pattern.permute.xlu0 0
    %1795 = vperm.xlu0 %1794, %v1528
    %v1796 = vpop.permute.xlu0 %1795
    %1797 = vset.pattern.permute.xlu0 0
    %1798 = vperm.xlu0 %1797, %v1529
    %v1799 = vpop.permute.xlu0 %1798
    %1800 = vset.pattern.permute.xlu0 0
    %1801 = vperm.xlu0 %1800, %v1530
    %v1802 = vpop.permute.xlu0 %1801
    %1803 = vset.pattern.permute.xlu0 0
    %1804 = vperm.xlu0 %1803, %v1531
    %v1805 = vpop.permute.xlu0 %1804
    %1806 = vset.pattern.permute.xlu0 0
    %1807 = vperm.xlu0 %1806, %v1532
    %v1808 = vpop.permute.xlu0 %1807
    %1809 = vset.pattern.permute.xlu0 0
    %1810 = vperm.xlu0 %1809, %v1533
    %v1811 = vpop.permute.xlu0 %1810
    %1812 = vset.pattern.permute.xlu0 0
    %1813 = vperm.xlu0 %1812, %v1534
    %v1814 = vpop.permute.xlu0 %1813
    %1815 = vset.pattern.permute.xlu0 0
    %1816 = vperm.xlu0 %1815, %v1535
    %v1817 = vpop.permute.xlu0 %1816
    %1818 = vset.pattern.permute.xlu0 0
    %1819 = vperm.xlu0 %1818, %v1536
    %v1820 = vpop.permute.xlu0 %1819
    %1821 = vset.pattern.permute.xlu0 0
    %1822 = vperm.xlu0 %1821, %v1537
    %v1823 = vpop.permute.xlu0 %1822
    %1824 = vset.pattern.permute.xlu0 0
    %1825 = vperm.xlu0 %1824, %v1538
    %v1826 = vpop.permute.xlu0 %1825
    %1827 = vset.pattern.permute.xlu0 0
    %1828 = vperm.xlu0 %1827, %v1539
    %v1829 = vpop.permute.xlu0 %1828
    %1830 = vset.pattern.permute.xlu0 0
    %1831 = vperm.xlu0 %1830, %v1540
    %v1832 = vpop.permute.xlu0 %1831
    %1833 = vset.pattern.permute.xlu0 0
    %1834 = vperm.xlu0 %1833, %v1541
    %v1835 = vpop.permute.xlu0 %1834
    %1836 = vset.pattern.permute.xlu0 0
    %1837 = vperm.xlu0 %1836, %v1542
    %v1838 = vpop.permute.xlu0 %1837
    %1839 = vset.pattern.permute.xlu0 0
    %1840 = vperm.xlu0 %1839, %v1543
    %v1841 = vpop.permute.xlu0 %1840
    %1842 = vset.pattern.permute.xlu0 0
    %1843 = vperm.xlu0 %1842, %v1544
    %v1844 = vpop.permute.xlu0 %1843
    %1845 = vset.pattern.permute.xlu0 0
    %1846 = vperm.xlu0 %1845, %v1545
    %v1847 = vpop.permute.xlu0 %1846
    %1848 = vset.pattern.permute.xlu0 0
    %1849 = vperm.xlu0 %1848, %v1546
    %v1850 = vpop.permute.xlu0 %1849
    %1851 = vset.pattern.permute.xlu0 0
    %1852 = vperm.xlu0 %1851, %v1547
    %v1853 = vpop.permute.xlu0 %1852
    %1854 = vset.pattern.permute.xlu0 0
    %1855 = vperm.xlu0 %1854, %v1548
    %v1856 = vpop.permute.xlu0 %1855
    %1857 = vset.pattern.permute.xlu0 0
    %1858 = vperm.xlu0 %1857, %v1549
    %v1859 = vpop.permute.xlu0 %1858
    %1860 = vset.pattern.permute.xlu0 0
    %1861 = vperm.xlu0 %1860, %v1550
    %v1862 = vpop.permute.xlu0 %1861
    %1863 = vset.pattern.permute.xlu0 0
    %1864 = vperm.xlu0 %1863, %v1551
    %v1865 = vpop.permute.xlu0 %1864
    %1866 = vset.pattern.permute.xlu0 0
    %1867 = vperm.xlu0 %1866, %v1552
    %v1868 = vpop.permute.xlu0 %1867
    %1869 = vset.pattern.permute.xlu0 0
    %1870 = vperm.xlu0 %1869, %v1553
    %v1871 = vpop.permute.xlu0 %1870
    %1872 = vset.pattern.permute.xlu0 0
    %1873 = vperm.xlu0 %1872, %v1554
    %v1874 = vpop.permute.xlu0 %1873
    %1875 = vset.pattern.permute.xlu0 0
    %1876 = vperm.xlu0 %1875, %v1555
    %v1877 = vpop.permute.xlu0 %1876
    %1878 = vset.pattern.permute.xlu0 0
    %1879 = vperm.xlu0 %1878, %v1556
    %v1880 = vpop.permute.xlu0 %1879
    %1881 = vset.pattern.permute.xlu0 0
    %1882 = vperm.xlu0 %1881, %v1557
    %v1883 = vpop.permute.xlu0 %1882
    %1884 = vset.pattern.permute.xlu0 0
    %1885 = vperm.xlu0 %1884, %v1558
    %v1886 = vpop.permute.xlu0 %1885
    %1887 = vset.pattern.permute.xlu0 0
    %1888 = vperm.xlu0 %1887, %v1559
    %v1889 = vpop.permute.xlu0 %1888
    %1890 = vset.pattern.permute.xlu0 0
    %1891 = vperm.xlu0 %1890, %v1560
    %v1892 = vpop.permute.xlu0 %1891
    %1893 = vset.pattern.permute.xlu0 0
    %1894 = vperm.xlu0 %1893, %v1561
    %v1895 = vpop.permute.xlu0 %1894
    %1896 = vset.pattern.permute.xlu0 0
    %1897 = vperm.xlu0 %1896, %v1562
    %v1898 = vpop.permute.xlu0 %1897
    %1899 = vset.pattern.permute.xlu0 0
    %1900 = vperm.xlu0 %1899, %v1563
    %v1901 = vpop.permute.xlu0 %1900
    %1902 = vset.pattern.permute.xlu0 0
    %1903 = vperm.xlu0 %1902, %v1564
    %v1904 = vpop.permute.xlu0 %1903
    %1905 = vset.pattern.permute.xlu0 0
    %1906 = vperm.xlu0 %1905, %v1565
    %v1907 = vpop.permute.xlu0 %1906
    %1908 = vset.pattern.permute.xlu0 0
    %1909 = vperm.xlu0 %1908, %v1566
    %v1910 = vpop.permute.xlu0 %1909
    %1911 = vset.pattern.permute.xlu0 0
    %1912 = vperm.xlu0 %1911, %v1567
    %v1913 = vpop.permute.xlu0 %1912
    %1914 = vset.pattern.permute.xlu0 0
    %1915 = vperm.xlu0 %1914, %v1568
    %v1916 = vpop.permute.xlu0 %1915
    %1917 = vset.pattern.permute.xlu0 0
    %1918 = vperm.xlu0 %1917, %v1569
    %v1919 = vpop.permute.xlu0 %1918
    %1920 = vset.pattern.permute.xlu0 0
    %1921 = vperm.xlu0 %1920, %v1570
    %v1922 = vpop.permute.xlu0 %1921
    %1923 = vset.pattern.permute.xlu0 0
    %1924 = vperm.xlu0 %1923, %v1571
    %v1925 = vpop.permute.xlu0 %1924
    %1926 = vset.pattern.permute.xlu0 0
    %1927 = vperm.xlu0 %1926, %v1572
    %v1928 = vpop.permute.xlu0 %1927
    %1929 = vset.pattern.permute.xlu0 0
    %1930 = vperm.xlu0 %1929, %v1573
    %v1931 = vpop.permute.xlu0 %1930
    %1932 = vset.pattern.permute.xlu0 0
    %1933 = vperm.xlu0 %1932, %v1574
    %v1934 = vpop.permute.xlu0 %1933
    %1935 = vset.pattern.permute.xlu0 0
    %1936 = vperm.xlu0 %1935, %v1575
    %v1937 = vpop.permute.xlu0 %1936
    %1938 = vset.pattern.permute.xlu0 0
    %1939 = vperm.xlu0 %1938, %v1576
    %v1940 = vpop.permute.xlu0 %1939
    %1941 = vset.pattern.permute.xlu0 0
    %1942 = vperm.xlu0 %1941, %v1577
    %v1943 = vpop.permute.xlu0 %1942
    %1944 = vset.pattern.permute.xlu0 0
    %1945 = vperm.xlu0 %1944, %v1578
    %v1946 = vpop.permute.xlu0 %1945
    %1947 = vset.pattern.permute.xlu0 0
    %1948 = vperm.xlu0 %1947, %v1579
    %v1949 = vpop.permute.xlu0 %1948
    %1950 = vset.pattern.permute.xlu0 0
    %1951 = vperm.xlu0 %1950, %v1580
    %v1952 = vpop.permute.xlu0 %1951
    %1953 = vset.pattern.permute.xlu0 0
    %1954 = vperm.xlu0 %1953, %v1581
    %v1955 = vpop.permute.xlu0 %1954
    %1956 = vset.pattern.permute.xlu0 0
    %1957 = vperm.xlu0 %1956, %v1582
    %v1958 = vpop.permute.xlu0 %1957
    %1959 = vset.pattern.permute.xlu0 0
    %1960 = vperm.xlu0 %1959, %v1583
    %v1961 = vpop.permute.xlu0 %1960
    %1962 = vset.pattern.permute.xlu0 0
    %1963 = vperm.xlu0 %1962, %v1584
    %v1964 = vpop.permute.xlu0 %1963
    %1965 = vset.pattern.permute.xlu0 0
    %1966 = vperm.xlu0 %1965, %v1585
    %v1967 = vpop.permute.xlu0 %1966
    %1968 = vset.pattern.permute.xlu0 0
    %1969 = vperm.xlu0 %1968, %v1586
    %v1970 = vpop.permute.xlu0 %1969
    %1971 = vset.pattern.permute.xlu0 0
    %1972 = vperm.xlu0 %1971, %v1587
    %v1973 = vpop.permute.xlu0 %1972
    %1974 = vset.pattern.permute.xlu0 0
    %1975 = vperm.xlu0 %1974, %v1588
    %v1976 = vpop.permute.xlu0 %1975
    %1977 = vset.pattern.permute.xlu0 0
    %1978 = vperm.xlu0 %1977, %v1589
    %v1979 = vpop.permute.xlu0 %1978
    %1980 = vset.pattern.permute.xlu0 0
    %1981 = vperm.xlu0 %1980, %v1590
    %v1982 = vpop.permute.xlu0 %1981
    %1983 = vset.pattern.permute.xlu0 0
    %1984 = vperm.xlu0 %1983, %v1591
    %v1985 = vpop.permute.xlu0 %1984
    %1986 = vset.pattern.permute.xlu0 0
    %1987 = vperm.xlu0 %1986, %v1592
    %v1988 = vpop.permute.xlu0 %1987
    %1989 = vset.pattern.permute.xlu0 0
    %1990 = vperm.xlu0 %1989, %v1593
    %v1991 = vpop.permute.xlu0 %1990
    %1992 = vset.pattern.permute.xlu0 0
    %1993 = vperm.xlu0 %1992, %v1594
    %v1994 = vpop.permute.xlu0 %1993
    %1995 = vset.pattern.permute.xlu0 0
    %1996 = vperm.xlu0 %1995, %v1595
    %v1997 = vpop.permute.xlu0 %1996
    %1998 = vset.pattern.permute.xlu0 0
    %1999 = vperm.xlu0 %1998, %v1596
    %v2000 = vpop.permute.xlu0 %1999
    %2001 = vset.pattern.permute.xlu0 0
    %2002 = vperm.xlu0 %2001, %v1597
    %v2003 = vpop.permute.xlu0 %2002
    %2004 = vset.pattern.permute.xlu0 0
    %2005 = vperm.xlu0 %2004, %v1598
    %v2006 = vpop.permute.xlu0 %2005
    %2007 = vset.pattern.permute.xlu0 0
    %2008 = vperm.xlu0 %2007, %v1599
    %v2009 = vpop.permute.xlu0 %2008
    %2010 = vset.pattern.permute.xlu0 0
    %2011 = vperm.xlu0 %2010, %v1600
    %v2012 = vpop.permute.xlu0 %2011
    %2013 = vset.pattern.permute.xlu0 0
    %2014 = vperm.xlu0 %2013, %v1601
    %v2015 = vpop.permute.xlu0 %2014
    %2016 = vset.pattern.permute.xlu0 0
    %2017 = vperm.xlu0 %2016, %v1602
    %v2018 = vpop.permute.xlu0 %2017
    %2019 = vset.pattern.permute.xlu0 0
    %2020 = vperm.xlu0 %2019, %v1603
    %v2021 = vpop.permute.xlu0 %2020
    %2022 = vset.pattern.permute.xlu0 0
    %2023 = vperm.xlu0 %2022, %v1604
    %v2024 = vpop.permute.xlu0 %2023
    %2025 = vset.pattern.permute.xlu0 0
    %2026 = vperm.xlu0 %2025, %v1605
    %v2027 = vpop.permute.xlu0 %2026
    %2028 = vset.pattern.permute.xlu0 0
    %2029 = vperm.xlu0 %2028, %v1606
    %v2030 = vpop.permute.xlu0 %2029
    %2031 = vset.pattern.permute.xlu0 0
    %2032 = vperm.xlu0 %2031, %v1607
    %v2033 = vpop.permute.xlu0 %2032
    %2034 = vset.pattern.permute.xlu0 0
    %2035 = vperm.xlu0 %2034, %v1608
    %v2036 = vpop.permute.xlu0 %2035
    %2037 = vset.pattern.permute.xlu0 0
    %2038 = vperm.xlu0 %2037, %v1609
    %v2039 = vpop.permute.xlu0 %2038
    %2040 = vset.pattern.permute.xlu0 0
    %2041 = vperm.xlu0 %2040, %v1610
    %v2042 = vpop.permute.xlu0 %2041
    %2043 = vset.pattern.permute.xlu0 0
    %2044 = vperm.xlu0 %2043, %v1611
    %v2045 = vpop.permute.xlu0 %2044
    %2046 = vset.pattern.permute.xlu0 0
    %2047 = vperm.xlu0 %2046, %v1612
    %v2048 = vpop.permute.xlu0 %2047
    %2049 = vset.pattern.permute.xlu0 0
    %2050 = vperm.xlu0 %2049, %v1613
    %v2051 = vpop.permute.xlu0 %2050
    %2052 = vset.pattern.permute.xlu0 0
    %2053 = vperm.xlu0 %2052, %v1614
    %v2054 = vpop.permute.xlu0 %2053
    %2055 = vset.pattern.permute.xlu0 0
    %2056 = vperm.xlu0 %2055, %v1615
    %v2057 = vpop.permute.xlu0 %2056
    %2058 = vset.pattern.permute.xlu0 0
    %2059 = vperm.xlu0 %2058, %v1616
    %v2060 = vpop.permute.xlu0 %2059
    %2061 = vset.pattern.permute.xlu0 0
    %2062 = vperm.xlu0 %2061, %v1617
    %v2063 = vpop.permute.xlu0 %2062
    %2064 = vset.pattern.permute.xlu0 0
    %2065 = vperm.xlu0 %2064, %v1618
    %v2066 = vpop.permute.xlu0 %2065
    %2067 = vset.pattern.permute.xlu0 0
    %2068 = vperm.xlu0 %2067, %v1619
    %v2069 = vpop.permute.xlu0 %2068
    %2070 = vset.pattern.permute.xlu0 0
    %2071 = vperm.xlu0 %2070, %v1620
    %v2072 = vpop.permute.xlu0 %2071
    %2073 = vset.pattern.permute.xlu0 0
    %2074 = vperm.xlu0 %2073, %v1621
    %v2075 = vpop.permute.xlu0 %2074
    %2076 = vset.pattern.permute.xlu0 0
    %2077 = vperm.xlu0 %2076, %v1622
    %v2078 = vpop.permute.xlu0 %2077
    %2079 = vset.pattern.permute.xlu0 0
    %2080 = vperm.xlu0 %2079, %v1623
    %v2081 = vpop.permute.xlu0 %2080
    %2082 = vset.pattern.permute.xlu0 0
    %2083 = vperm.xlu0 %2082, %v1624
    %v2084 = vpop.permute.xlu0 %2083
    %2085 = vset.pattern.permute.xlu0 0
    %2086 = vperm.xlu0 %2085, %v1625
    %v2087 = vpop.permute.xlu0 %2086
    %2088 = vset.pattern.permute.xlu0 0
    %2089 = vperm.xlu0 %2088, %v1626
    %v2090 = vpop.permute.xlu0 %2089
    %2091 = vset.pattern.permute.xlu0 0
    %2092 = vperm.xlu0 %2091, %v1627
    %v2093 = vpop.permute.xlu0 %2092
    %2094 = vset.pattern.permute.xlu0 0
    %2095 = vperm.xlu0 %2094, %v1628
    %v2096 = vpop.permute.xlu0 %2095
    %2097 = vset.pattern.permute.xlu0 0
    %2098 = vperm.xlu0 %2097, %v1629
    %v2099 = vpop.permute.xlu0 %2098
    %2100 = vset.pattern.permute.xlu0 0
    %2101 = vperm.xlu0 %2100, %v1630
    %v2102 = vpop.permute.xlu0 %2101
    %2103 = vset.pattern.permute.xlu0 0
    %2104 = vperm.xlu0 %2103, %v1631
    %v2105 = vpop.permute.xlu0 %2104
    %2106 = vset.pattern.permute.xlu0 0
    %2107 = vperm.xlu0 %2106, %v1632
    %v2108 = vpop.permute.xlu0 %2107
    %2109 = vset.pattern.permute.xlu0 0
    %2110 = vperm.xlu0 %2109, %v1633
    %v2111 = vpop.permute.xlu0 %2110
    %2112 = vset.pattern.permute.xlu0 0
    %2113 = vperm.xlu0 %2112, %v1634
    %v2114 = vpop.permute.xlu0 %2113
    %2115 = vset.pattern.permute.xlu0 0
    %2116 = vperm.xlu0 %2115, %v1635
    %v2117 = vpop.permute.xlu0 %2116
    %2118 = vset.pattern.permute.xlu0 0
    %2119 = vperm.xlu0 %2118, %v1636
    %v2120 = vpop.permute.xlu0 %2119
    %2121 = vset.pattern.permute.xlu0 0
    %2122 = vperm.xlu0 %2121, %v1637
    %v2123 = vpop.permute.xlu0 %2122
    %2124 = vset.pattern.permute.xlu0 0
    %2125 = vperm.xlu0 %2124, %v1638
    %v2126 = vpop.permute.xlu0 %2125
    %2127 = vset.pattern.permute.xlu0 0
    %2128 = vperm.xlu0 %2127, %v1639
    %v2129 = vpop.permute.xlu0 %2128
    %2130 = vset.pattern.permute.xlu0 0
    %2131 = vperm.xlu0 %2130, %v1640
    %v2132 = vpop.permute.xlu0 %2131
    %2133 = vset.pattern.permute.xlu0 0
    %2134 = vperm.xlu0 %2133, %v1641
    %v2135 = vpop.permute.xlu0 %2134
    %2136 = vset.pattern.permute.xlu0 0
    %2137 = vperm.xlu0 %2136, %v1642
    %v2138 = vpop.permute.xlu0 %2137
    %2139 = vset.pattern.permute.xlu0 0
    %2140 = vperm.xlu0 %2139, %v1643
    %v2141 = vpop.permute.xlu0 %2140
    %2142 = vset.pattern.permute.xlu0 0
    %2143 = vperm.xlu0 %2142, %v1644
    %v2144 = vpop.permute.xlu0 %2143
    %2145 = vset.pattern.permute.xlu0 0
    %2146 = vperm.xlu0 %2145, %v1645
    %v2147 = vpop.permute.xlu0 %2146
    %2148 = vset.pattern.permute.xlu0 0
    %2149 = vperm.xlu0 %2148, %v1646
    %v2150 = vpop.permute.xlu0 %2149
    %2151 = vset.pattern.permute.xlu0 0
    %2152 = vperm.xlu0 %2151, %v1647
    %v2153 = vpop.permute.xlu0 %2152
    %2154 = vset.pattern.permute.xlu0 0
    %2155 = vperm.xlu0 %2154, %v1648
    %v2156 = vpop.permute.xlu0 %2155
    %2157 = vset.pattern.permute.xlu0 0
    %2158 = vperm.xlu0 %2157, %v1649
    %v2159 = vpop.permute.xlu0 %2158
    %2160 = vset.pattern.permute.xlu0 0
    %2161 = vperm.xlu0 %2160, %v1650
    %v2162 = vpop.permute.xlu0 %2161
    %v2163 = vlaneseq
    %v2164 = vshrl.u32 %v2163, 7
    %v2165 = vsub.s32 %v630, %v2164
    %v2166 = vrot.slane %v1781, %v2165
    %v2167 = vlaneseq
    %v2168 = vshrl.u32 %v2167, 7
    %v2169 = vsub.s32 %v630, %v2168
    %v2170 = vrot.slane %v1784, %v2169
    %v2171 = vlaneseq
    %v2172 = vshrl.u32 %v2171, 7
    %v2173 = vsub.s32 %v630, %v2172
    %v2174 = vrot.slane %v1787, %v2173
    %v2175 = vlaneseq
    %v2176 = vshrl.u32 %v2175, 7
    %v2177 = vsub.s32 %v630, %v2176
    %v2178 = vrot.slane %v1790, %v2177
    %v2179 = vlaneseq
    %v2180 = vshrl.u32 %v2179, 7
    %v2181 = vsub.s32 %v630, %v2180
    %v2182 = vrot.slane %v1793, %v2181
    %v2183 = vlaneseq
    %v2184 = vshrl.u32 %v2183, 7
    %v2185 = vsub.s32 %v630, %v2184
    %v2186 = vrot.slane %v1796, %v2185
    %v2187 = vlaneseq
    %v2188 = vshrl.u32 %v2187, 7
    %v2189 = vsub.s32 %v630, %v2188
    %v2190 = vrot.slane %v1799, %v2189
    %v2191 = vlaneseq
    %v2192 = vshrl.u32 %v2191, 7
    %v2193 = vsub.s32 %v630, %v2192
    %v2194 = vrot.slane %v1802, %v2193
    %v2195 = vlaneseq
    %v2196 = vshrl.u32 %v2195, 7
    %v2197 = vsub.s32 %v630, %v2196
    %v2198 = vrot.slane %v1805, %v2197
    %v2199 = vlaneseq
    %v2200 = vshrl.u32 %v2199, 7
    %v2201 = vsub.s32 %v630, %v2200
    %v2202 = vrot.slane %v1808, %v2201
    %v2203 = vlaneseq
    %v2204 = vshrl.u32 %v2203, 7
    %v2205 = vsub.s32 %v630, %v2204
    %v2206 = vrot.slane %v1811, %v2205
    %v2207 = vlaneseq
    %v2208 = vshrl.u32 %v2207, 7
    %v2209 = vsub.s32 %v630, %v2208
    %v2210 = vrot.slane %v1814, %v2209
    %v2211 = vlaneseq
    %v2212 = vshrl.u32 %v2211, 7
    %v2213 = vsub.s32 %v630, %v2212
    %v2214 = vrot.slane %v1817, %v2213
    %v2215 = vlaneseq
    %v2216 = vshrl.u32 %v2215, 7
    %v2217 = vsub.s32 %v630, %v2216
    %v2218 = vrot.slane %v1820, %v2217
    %v2219 = vlaneseq
    %v2220 = vshrl.u32 %v2219, 7
    %v2221 = vsub.s32 %v630, %v2220
    %v2222 = vrot.slane %v1823, %v2221
    %v2223 = vlaneseq
    %v2224 = vshrl.u32 %v2223, 7
    %v2225 = vsub.s32 %v630, %v2224
    %v2226 = vrot.slane %v1826, %v2225
    %v2227 = vlaneseq
    %v2228 = vshrl.u32 %v2227, 7
    %v2229 = vsub.s32 %v630, %v2228
    %v2230 = vrot.slane %v1829, %v2229
    %v2231 = vlaneseq
    %v2232 = vshrl.u32 %v2231, 7
    %v2233 = vsub.s32 %v630, %v2232
    %v2234 = vrot.slane %v1832, %v2233
    %v2235 = vlaneseq
    %v2236 = vshrl.u32 %v2235, 7
    %v2237 = vsub.s32 %v630, %v2236
    %v2238 = vrot.slane %v1835, %v2237
    %v2239 = vlaneseq
    %v2240 = vshrl.u32 %v2239, 7
    %v2241 = vsub.s32 %v630, %v2240
    %v2242 = vrot.slane %v1838, %v2241
    %v2243 = vlaneseq
    %v2244 = vshrl.u32 %v2243, 7
    %v2245 = vsub.s32 %v630, %v2244
    %v2246 = vrot.slane %v1841, %v2245
    %v2247 = vlaneseq
    %v2248 = vshrl.u32 %v2247, 7
    %v2249 = vsub.s32 %v630, %v2248
    %v2250 = vrot.slane %v1844, %v2249
    %v2251 = vlaneseq
    %v2252 = vshrl.u32 %v2251, 7
    %v2253 = vsub.s32 %v630, %v2252
    %v2254 = vrot.slane %v1847, %v2253
    %v2255 = vlaneseq
    %v2256 = vshrl.u32 %v2255, 7
    %v2257 = vsub.s32 %v630, %v2256
    %v2258 = vrot.slane %v1850, %v2257
    %v2259 = vlaneseq
    %v2260 = vshrl.u32 %v2259, 7
    %v2261 = vsub.s32 %v630, %v2260
    %v2262 = vrot.slane %v1853, %v2261
    %v2263 = vlaneseq
    %v2264 = vshrl.u32 %v2263, 7
    %v2265 = vsub.s32 %v630, %v2264
    %v2266 = vrot.slane %v1856, %v2265
    %v2267 = vlaneseq
    %v2268 = vshrl.u32 %v2267, 7
    %v2269 = vsub.s32 %v630, %v2268
    %v2270 = vrot.slane %v1859, %v2269
    %v2271 = vlaneseq
    %v2272 = vshrl.u32 %v2271, 7
    %v2273 = vsub.s32 %v630, %v2272
    %v2274 = vrot.slane %v1862, %v2273
    %v2275 = vlaneseq
    %v2276 = vshrl.u32 %v2275, 7
    %v2277 = vsub.s32 %v630, %v2276
    %v2278 = vrot.slane %v1865, %v2277
    %v2279 = vlaneseq
    %v2280 = vshrl.u32 %v2279, 7
    %v2281 = vsub.s32 %v630, %v2280
    %v2282 = vrot.slane %v1868, %v2281
    %v2283 = vlaneseq
    %v2284 = vshrl.u32 %v2283, 7
    %v2285 = vsub.s32 %v630, %v2284
    %v2286 = vrot.slane %v1871, %v2285
    %v2287 = vlaneseq
    %v2288 = vshrl.u32 %v2287, 7
    %v2289 = vsub.s32 %v630, %v2288
    %v2290 = vrot.slane %v1874, %v2289
    %v2291 = vlaneseq
    %v2292 = vshrl.u32 %v2291, 7
    %v2293 = vsub.s32 %v630, %v2292
    %v2294 = vrot.slane %v1877, %v2293
    %v2295 = vlaneseq
    %v2296 = vshrl.u32 %v2295, 7
    %v2297 = vsub.s32 %v630, %v2296
    %v2298 = vrot.slane %v1880, %v2297
    %v2299 = vlaneseq
    %v2300 = vshrl.u32 %v2299, 7
    %v2301 = vsub.s32 %v630, %v2300
    %v2302 = vrot.slane %v1883, %v2301
    %v2303 = vlaneseq
    %v2304 = vshrl.u32 %v2303, 7
    %v2305 = vsub.s32 %v630, %v2304
    %v2306 = vrot.slane %v1886, %v2305
    %v2307 = vlaneseq
    %v2308 = vshrl.u32 %v2307, 7
    %v2309 = vsub.s32 %v630, %v2308
    %v2310 = vrot.slane %v1889, %v2309
    %v2311 = vlaneseq
    %v2312 = vshrl.u32 %v2311, 7
    %v2313 = vsub.s32 %v630, %v2312
    %v2314 = vrot.slane %v1892, %v2313
    %v2315 = vlaneseq
    %v2316 = vshrl.u32 %v2315, 7
    %v2317 = vsub.s32 %v630, %v2316
    %v2318 = vrot.slane %v1895, %v2317
    %v2319 = vlaneseq
    %v2320 = vshrl.u32 %v2319, 7
    %v2321 = vsub.s32 %v630, %v2320
    %v2322 = vrot.slane %v1898, %v2321
    %v2323 = vlaneseq
    %v2324 = vshrl.u32 %v2323, 7
    %v2325 = vsub.s32 %v630, %v2324
    %v2326 = vrot.slane %v1901, %v2325
    %v2327 = vlaneseq
    %v2328 = vshrl.u32 %v2327, 7
    %v2329 = vsub.s32 %v630, %v2328
    %v2330 = vrot.slane %v1904, %v2329
    %v2331 = vlaneseq
    %v2332 = vshrl.u32 %v2331, 7
    %v2333 = vsub.s32 %v630, %v2332
    %v2334 = vrot.slane %v1907, %v2333
    %v2335 = vlaneseq
    %v2336 = vshrl.u32 %v2335, 7
    %v2337 = vsub.s32 %v630, %v2336
    %v2338 = vrot.slane %v1910, %v2337
    %v2339 = vlaneseq
    %v2340 = vshrl.u32 %v2339, 7
    %v2341 = vsub.s32 %v630, %v2340
    %v2342 = vrot.slane %v1913, %v2341
    %v2343 = vlaneseq
    %v2344 = vshrl.u32 %v2343, 7
    %v2345 = vsub.s32 %v630, %v2344
    %v2346 = vrot.slane %v1916, %v2345
    %v2347 = vlaneseq
    %v2348 = vshrl.u32 %v2347, 7
    %v2349 = vsub.s32 %v630, %v2348
    %v2350 = vrot.slane %v1919, %v2349
    %v2351 = vlaneseq
    %v2352 = vshrl.u32 %v2351, 7
    %v2353 = vsub.s32 %v630, %v2352
    %v2354 = vrot.slane %v1922, %v2353
    %v2355 = vlaneseq
    %v2356 = vshrl.u32 %v2355, 7
    %v2357 = vsub.s32 %v630, %v2356
    %v2358 = vrot.slane %v1925, %v2357
    %v2359 = vlaneseq
    %v2360 = vshrl.u32 %v2359, 7
    %v2361 = vsub.s32 %v630, %v2360
    %v2362 = vrot.slane %v1928, %v2361
    %v2363 = vlaneseq
    %v2364 = vshrl.u32 %v2363, 7
    %v2365 = vsub.s32 %v630, %v2364
    %v2366 = vrot.slane %v1931, %v2365
    %v2367 = vlaneseq
    %v2368 = vshrl.u32 %v2367, 7
    %v2369 = vsub.s32 %v630, %v2368
    %v2370 = vrot.slane %v1934, %v2369
    %v2371 = vlaneseq
    %v2372 = vshrl.u32 %v2371, 7
    %v2373 = vsub.s32 %v630, %v2372
    %v2374 = vrot.slane %v1937, %v2373
    %v2375 = vlaneseq
    %v2376 = vshrl.u32 %v2375, 7
    %v2377 = vsub.s32 %v630, %v2376
    %v2378 = vrot.slane %v1940, %v2377
    %v2379 = vlaneseq
    %v2380 = vshrl.u32 %v2379, 7
    %v2381 = vsub.s32 %v630, %v2380
    %v2382 = vrot.slane %v1943, %v2381
    %v2383 = vlaneseq
    %v2384 = vshrl.u32 %v2383, 7
    %v2385 = vsub.s32 %v630, %v2384
    %v2386 = vrot.slane %v1946, %v2385
    %v2387 = vlaneseq
    %v2388 = vshrl.u32 %v2387, 7
    %v2389 = vsub.s32 %v630, %v2388
    %v2390 = vrot.slane %v1949, %v2389
    %v2391 = vlaneseq
    %v2392 = vshrl.u32 %v2391, 7
    %v2393 = vsub.s32 %v630, %v2392
    %v2394 = vrot.slane %v1952, %v2393
    %v2395 = vlaneseq
    %v2396 = vshrl.u32 %v2395, 7
    %v2397 = vsub.s32 %v630, %v2396
    %v2398 = vrot.slane %v1955, %v2397
    %v2399 = vlaneseq
    %v2400 = vshrl.u32 %v2399, 7
    %v2401 = vsub.s32 %v630, %v2400
    %v2402 = vrot.slane %v1958, %v2401
    %v2403 = vlaneseq
    %v2404 = vshrl.u32 %v2403, 7
    %v2405 = vsub.s32 %v630, %v2404
    %v2406 = vrot.slane %v1961, %v2405
    %v2407 = vlaneseq
    %v2408 = vshrl.u32 %v2407, 7
    %v2409 = vsub.s32 %v630, %v2408
    %v2410 = vrot.slane %v1964, %v2409
    %v2411 = vlaneseq
    %v2412 = vshrl.u32 %v2411, 7
    %v2413 = vsub.s32 %v630, %v2412
    %v2414 = vrot.slane %v1967, %v2413
    %v2415 = vlaneseq
    %v2416 = vshrl.u32 %v2415, 7
    %v2417 = vsub.s32 %v630, %v2416
    %v2418 = vrot.slane %v1970, %v2417
    %v2419 = vlaneseq
    %v2420 = vshrl.u32 %v2419, 7
    %v2421 = vsub.s32 %v630, %v2420
    %v2422 = vrot.slane %v1973, %v2421
    %v2423 = vlaneseq
    %v2424 = vshrl.u32 %v2423, 7
    %v2425 = vsub.s32 %v630, %v2424
    %v2426 = vrot.slane %v1976, %v2425
    %v2427 = vlaneseq
    %v2428 = vshrl.u32 %v2427, 7
    %v2429 = vsub.s32 %v630, %v2428
    %v2430 = vrot.slane %v1979, %v2429
    %v2431 = vlaneseq
    %v2432 = vshrl.u32 %v2431, 7
    %v2433 = vsub.s32 %v630, %v2432
    %v2434 = vrot.slane %v1982, %v2433
    %v2435 = vlaneseq
    %v2436 = vshrl.u32 %v2435, 7
    %v2437 = vsub.s32 %v630, %v2436
    %v2438 = vrot.slane %v1985, %v2437
    %v2439 = vlaneseq
    %v2440 = vshrl.u32 %v2439, 7
    %v2441 = vsub.s32 %v630, %v2440
    %v2442 = vrot.slane %v1988, %v2441
    %v2443 = vlaneseq
    %v2444 = vshrl.u32 %v2443, 7
    %v2445 = vsub.s32 %v630, %v2444
    %v2446 = vrot.slane %v1991, %v2445
    %v2447 = vlaneseq
    %v2448 = vshrl.u32 %v2447, 7
    %v2449 = vsub.s32 %v630, %v2448
    %v2450 = vrot.slane %v1994, %v2449
    %v2451 = vlaneseq
    %v2452 = vshrl.u32 %v2451, 7
    %v2453 = vsub.s32 %v630, %v2452
    %v2454 = vrot.slane %v1997, %v2453
    %v2455 = vlaneseq
    %v2456 = vshrl.u32 %v2455, 7
    %v2457 = vsub.s32 %v630, %v2456
    %v2458 = vrot.slane %v2000, %v2457
    %v2459 = vlaneseq
    %v2460 = vshrl.u32 %v2459, 7
    %v2461 = vsub.s32 %v630, %v2460
    %v2462 = vrot.slane %v2003, %v2461
    %v2463 = vlaneseq
    %v2464 = vshrl.u32 %v2463, 7
    %v2465 = vsub.s32 %v630, %v2464
    %v2466 = vrot.slane %v2006, %v2465
    %v2467 = vlaneseq
    %v2468 = vshrl.u32 %v2467, 7
    %v2469 = vsub.s32 %v630, %v2468
    %v2470 = vrot.slane %v2009, %v2469
    %v2471 = vlaneseq
    %v2472 = vshrl.u32 %v2471, 7
    %v2473 = vsub.s32 %v630, %v2472
    %v2474 = vrot.slane %v2012, %v2473
    %v2475 = vlaneseq
    %v2476 = vshrl.u32 %v2475, 7
    %v2477 = vsub.s32 %v630, %v2476
    %v2478 = vrot.slane %v2015, %v2477
    %v2479 = vlaneseq
    %v2480 = vshrl.u32 %v2479, 7
    %v2481 = vsub.s32 %v630, %v2480
    %v2482 = vrot.slane %v2018, %v2481
    %v2483 = vlaneseq
    %v2484 = vshrl.u32 %v2483, 7
    %v2485 = vsub.s32 %v630, %v2484
    %v2486 = vrot.slane %v2021, %v2485
    %v2487 = vlaneseq
    %v2488 = vshrl.u32 %v2487, 7
    %v2489 = vsub.s32 %v630, %v2488
    %v2490 = vrot.slane %v2024, %v2489
    %v2491 = vlaneseq
    %v2492 = vshrl.u32 %v2491, 7
    %v2493 = vsub.s32 %v630, %v2492
    %v2494 = vrot.slane %v2027, %v2493
    %v2495 = vlaneseq
    %v2496 = vshrl.u32 %v2495, 7
    %v2497 = vsub.s32 %v630, %v2496
    %v2498 = vrot.slane %v2030, %v2497
    %v2499 = vlaneseq
    %v2500 = vshrl.u32 %v2499, 7
    %v2501 = vsub.s32 %v630, %v2500
    %v2502 = vrot.slane %v2033, %v2501
    %v2503 = vlaneseq
    %v2504 = vshrl.u32 %v2503, 7
    %v2505 = vsub.s32 %v630, %v2504
    %v2506 = vrot.slane %v2036, %v2505
    %v2507 = vlaneseq
    %v2508 = vshrl.u32 %v2507, 7
    %v2509 = vsub.s32 %v630, %v2508
    %v2510 = vrot.slane %v2039, %v2509
    %v2511 = vlaneseq
    %v2512 = vshrl.u32 %v2511, 7
    %v2513 = vsub.s32 %v630, %v2512
    %v2514 = vrot.slane %v2042, %v2513
    %v2515 = vlaneseq
    %v2516 = vshrl.u32 %v2515, 7
    %v2517 = vsub.s32 %v630, %v2516
    %v2518 = vrot.slane %v2045, %v2517
    %v2519 = vlaneseq
    %v2520 = vshrl.u32 %v2519, 7
    %v2521 = vsub.s32 %v630, %v2520
    %v2522 = vrot.slane %v2048, %v2521
    %v2523 = vlaneseq
    %v2524 = vshrl.u32 %v2523, 7
    %v2525 = vsub.s32 %v630, %v2524
    %v2526 = vrot.slane %v2051, %v2525
    %v2527 = vlaneseq
    %v2528 = vshrl.u32 %v2527, 7
    %v2529 = vsub.s32 %v630, %v2528
    %v2530 = vrot.slane %v2054, %v2529
    %v2531 = vlaneseq
    %v2532 = vshrl.u32 %v2531, 7
    %v2533 = vsub.s32 %v630, %v2532
    %v2534 = vrot.slane %v2057, %v2533
    %v2535 = vlaneseq
    %v2536 = vshrl.u32 %v2535, 7
    %v2537 = vsub.s32 %v630, %v2536
    %v2538 = vrot.slane %v2060, %v2537
    %v2539 = vlaneseq
    %v2540 = vshrl.u32 %v2539, 7
    %v2541 = vsub.s32 %v630, %v2540
    %v2542 = vrot.slane %v2063, %v2541
    %v2543 = vlaneseq
    %v2544 = vshrl.u32 %v2543, 7
    %v2545 = vsub.s32 %v630, %v2544
    %v2546 = vrot.slane %v2066, %v2545
    %v2547 = vlaneseq
    %v2548 = vshrl.u32 %v2547, 7
    %v2549 = vsub.s32 %v630, %v2548
    %v2550 = vrot.slane %v2069, %v2549
    %v2551 = vlaneseq
    %v2552 = vshrl.u32 %v2551, 7
    %v2553 = vsub.s32 %v630, %v2552
    %v2554 = vrot.slane %v2072, %v2553
    %v2555 = vlaneseq
    %v2556 = vshrl.u32 %v2555, 7
    %v2557 = vsub.s32 %v630, %v2556
    %v2558 = vrot.slane %v2075, %v2557
    %v2559 = vlaneseq
    %v2560 = vshrl.u32 %v2559, 7
    %v2561 = vsub.s32 %v630, %v2560
    %v2562 = vrot.slane %v2078, %v2561
    %v2563 = vlaneseq
    %v2564 = vshrl.u32 %v2563, 7
    %v2565 = vsub.s32 %v630, %v2564
    %v2566 = vrot.slane %v2081, %v2565
    %v2567 = vlaneseq
    %v2568 = vshrl.u32 %v2567, 7
    %v2569 = vsub.s32 %v630, %v2568
    %v2570 = vrot.slane %v2084, %v2569
    %v2571 = vlaneseq
    %v2572 = vshrl.u32 %v2571, 7
    %v2573 = vsub.s32 %v630, %v2572
    %v2574 = vrot.slane %v2087, %v2573
    %v2575 = vlaneseq
    %v2576 = vshrl.u32 %v2575, 7
    %v2577 = vsub.s32 %v630, %v2576
    %v2578 = vrot.slane %v2090, %v2577
    %v2579 = vlaneseq
    %v2580 = vshrl.u32 %v2579, 7
    %v2581 = vsub.s32 %v630, %v2580
    %v2582 = vrot.slane %v2093, %v2581
    %v2583 = vlaneseq
    %v2584 = vshrl.u32 %v2583, 7
    %v2585 = vsub.s32 %v630, %v2584
    %v2586 = vrot.slane %v2096, %v2585
    %v2587 = vlaneseq
    %v2588 = vshrl.u32 %v2587, 7
    %v2589 = vsub.s32 %v630, %v2588
    %v2590 = vrot.slane %v2099, %v2589
    %v2591 = vlaneseq
    %v2592 = vshrl.u32 %v2591, 7
    %v2593 = vsub.s32 %v630, %v2592
    %v2594 = vrot.slane %v2102, %v2593
    %v2595 = vlaneseq
    %v2596 = vshrl.u32 %v2595, 7
    %v2597 = vsub.s32 %v630, %v2596
    %v2598 = vrot.slane %v2105, %v2597
    %v2599 = vlaneseq
    %v2600 = vshrl.u32 %v2599, 7
    %v2601 = vsub.s32 %v630, %v2600
    %v2602 = vrot.slane %v2108, %v2601
    %v2603 = vlaneseq
    %v2604 = vshrl.u32 %v2603, 7
    %v2605 = vsub.s32 %v630, %v2604
    %v2606 = vrot.slane %v2111, %v2605
    %v2607 = vlaneseq
    %v2608 = vshrl.u32 %v2607, 7
    %v2609 = vsub.s32 %v630, %v2608
    %v2610 = vrot.slane %v2114, %v2609
    %v2611 = vlaneseq
    %v2612 = vshrl.u32 %v2611, 7
    %v2613 = vsub.s32 %v630, %v2612
    %v2614 = vrot.slane %v2117, %v2613
    %v2615 = vlaneseq
    %v2616 = vshrl.u32 %v2615, 7
    %v2617 = vsub.s32 %v630, %v2616
    %v2618 = vrot.slane %v2120, %v2617
    %v2619 = vlaneseq
    %v2620 = vshrl.u32 %v2619, 7
    %v2621 = vsub.s32 %v630, %v2620
    %v2622 = vrot.slane %v2123, %v2621
    %v2623 = vlaneseq
    %v2624 = vshrl.u32 %v2623, 7
    %v2625 = vsub.s32 %v630, %v2624
    %v2626 = vrot.slane %v2126, %v2625
    %v2627 = vlaneseq
    %v2628 = vshrl.u32 %v2627, 7
    %v2629 = vsub.s32 %v630, %v2628
    %v2630 = vrot.slane %v2129, %v2629
    %v2631 = vlaneseq
    %v2632 = vshrl.u32 %v2631, 7
    %v2633 = vsub.s32 %v630, %v2632
    %v2634 = vrot.slane %v2132, %v2633
    %v2635 = vlaneseq
    %v2636 = vshrl.u32 %v2635, 7
    %v2637 = vsub.s32 %v630, %v2636
    %v2638 = vrot.slane %v2135, %v2637
    %v2639 = vlaneseq
    %v2640 = vshrl.u32 %v2639, 7
    %v2641 = vsub.s32 %v630, %v2640
    %v2642 = vrot.slane %v2138, %v2641
    %v2643 = vlaneseq
    %v2644 = vshrl.u32 %v2643, 7
    %v2645 = vsub.s32 %v630, %v2644
    %v2646 = vrot.slane %v2141, %v2645
    %v2647 = vlaneseq
    %v2648 = vshrl.u32 %v2647, 7
    %v2649 = vsub.s32 %v630, %v2648
    %v2650 = vrot.slane %v2144, %v2649
    %v2651 = vlaneseq
    %v2652 = vshrl.u32 %v2651, 7
    %v2653 = vsub.s32 %v630, %v2652
    %v2654 = vrot.slane %v2147, %v2653
    %v2655 = vlaneseq
    %v2656 = vshrl.u32 %v2655, 7
    %v2657 = vsub.s32 %v630, %v2656
    %v2658 = vrot.slane %v2150, %v2657
    %v2659 = vlaneseq
    %v2660 = vshrl.u32 %v2659, 7
    %v2661 = vsub.s32 %v630, %v2660
    %v2662 = vrot.slane %v2153, %v2661
    %v2663 = vlaneseq
    %v2664 = vshrl.u32 %v2663, 7
    %v2665 = vsub.s32 %v630, %v2664
    %v2666 = vrot.slane %v2156, %v2665
    %v2667 = vlaneseq
    %v2668 = vshrl.u32 %v2667, 7
    %v2669 = vsub.s32 %v630, %v2668
    %v2670 = vrot.slane %v2159, %v2669
    %v2671 = vlaneseq
    %v2672 = vshrl.u32 %v2671, 7
    %v2673 = vsub.s32 %v630, %v2672
    %v2674 = vrot.slane %v2162, %v2673
    %v2675 = vsel %vm957, %v2170, %v2166
    %v2676 = vsel %vm959, %v2174, %v2675
    %v2677 = vsel %vm961, %v2178, %v2676
    %vm2678 = vcmask 1044484
    %v2679 = vsel %vm2678, %v2182, %v2677
    %vm2680 = vcmask 1045509
    %v2681 = vsel %vm2680, %v2186, %v2679
    %vm2682 = vcmask 1046534
    %v2683 = vsel %vm2682, %v2190, %v2681
    %vm2684 = vcmask 1047559
    %v2685 = vsel %vm2684, %v2194, %v2683
    %v2686 = vsel %vm957, %v2202, %v2198
    %v2687 = vsel %vm959, %v2206, %v2686
    %v2688 = vsel %vm961, %v2210, %v2687
    %v2689 = vsel %vm2678, %v2214, %v2688
    %v2690 = vsel %vm2680, %v2218, %v2689
    %v2691 = vsel %vm2682, %v2222, %v2690
    %v2692 = vsel %vm2684, %v2226, %v2691
    %v2693 = vsel %vm957, %v2234, %v2230
    %v2694 = vsel %vm959, %v2238, %v2693
    %v2695 = vsel %vm961, %v2242, %v2694
    %v2696 = vsel %vm2678, %v2246, %v2695
    %v2697 = vsel %vm2680, %v2250, %v2696
    %v2698 = vsel %vm2682, %v2254, %v2697
    %v2699 = vsel %vm2684, %v2258, %v2698
    %v2700 = vsel %vm957, %v2266, %v2262
    %v2701 = vsel %vm959, %v2270, %v2700
    %v2702 = vsel %vm961, %v2274, %v2701
    %v2703 = vsel %vm2678, %v2278, %v2702
    %v2704 = vsel %vm2680, %v2282, %v2703
    %v2705 = vsel %vm2682, %v2286, %v2704
    %v2706 = vsel %vm2684, %v2290, %v2705
    %v2707 = vsel %vm957, %v2298, %v2294
    %v2708 = vsel %vm959, %v2302, %v2707
    %v2709 = vsel %vm961, %v2306, %v2708
    %v2710 = vsel %vm2678, %v2310, %v2709
    %v2711 = vsel %vm2680, %v2314, %v2710
    %v2712 = vsel %vm2682, %v2318, %v2711
    %v2713 = vsel %vm2684, %v2322, %v2712
    %v2714 = vsel %vm957, %v2330, %v2326
    %v2715 = vsel %vm959, %v2334, %v2714
    %v2716 = vsel %vm961, %v2338, %v2715
    %v2717 = vsel %vm2678, %v2342, %v2716
    %v2718 = vsel %vm2680, %v2346, %v2717
    %v2719 = vsel %vm2682, %v2350, %v2718
    %v2720 = vsel %vm2684, %v2354, %v2719
    %v2721 = vsel %vm957, %v2362, %v2358
    %v2722 = vsel %vm959, %v2366, %v2721
    %v2723 = vsel %vm961, %v2370, %v2722
    %v2724 = vsel %vm2678, %v2374, %v2723
    %v2725 = vsel %vm2680, %v2378, %v2724
    %v2726 = vsel %vm2682, %v2382, %v2725
    %v2727 = vsel %vm2684, %v2386, %v2726
    %v2728 = vsel %vm957, %v2394, %v2390
    %v2729 = vsel %vm959, %v2398, %v2728
    %v2730 = vsel %vm961, %v2402, %v2729
    %v2731 = vsel %vm2678, %v2406, %v2730
    %v2732 = vsel %vm2680, %v2410, %v2731
    %v2733 = vsel %vm2682, %v2414, %v2732
    %v2734 = vsel %vm2684, %v2418, %v2733
    %v2735 = vsel %vm957, %v2426, %v2422
    %v2736 = vsel %vm959, %v2430, %v2735
    %v2737 = vsel %vm961, %v2434, %v2736
    %v2738 = vsel %vm2678, %v2438, %v2737
    %v2739 = vsel %vm2680, %v2442, %v2738
    %v2740 = vsel %vm2682, %v2446, %v2739
    %v2741 = vsel %vm2684, %v2450, %v2740
    %v2742 = vsel %vm957, %v2458, %v2454
    %v2743 = vsel %vm959, %v2462, %v2742
    %v2744 = vsel %vm961, %v2466, %v2743
    %v2745 = vsel %vm2678, %v2470, %v2744
    %v2746 = vsel %vm2680, %v2474, %v2745
    %v2747 = vsel %vm2682, %v2478, %v2746
    %v2748 = vsel %vm2684, %v2482, %v2747
    %v2749 = vsel %vm957, %v2490, %v2486
    %v2750 = vsel %vm959, %v2494, %v2749
    %v2751 = vsel %vm961, %v2498, %v2750
    %v2752 = vsel %vm2678, %v2502, %v2751
    %v2753 = vsel %vm2680, %v2506, %v2752
    %v2754 = vsel %vm2682, %v2510, %v2753
    %v2755 = vsel %vm2684, %v2514, %v2754
    %v2756 = vsel %vm957, %v2522, %v2518
    %v2757 = vsel %vm959, %v2526, %v2756
    %v2758 = vsel %vm961, %v2530, %v2757
    %v2759 = vsel %vm2678, %v2534, %v2758
    %v2760 = vsel %vm2680, %v2538, %v2759
    %v2761 = vsel %vm2682, %v2542, %v2760
    %v2762 = vsel %vm2684, %v2546, %v2761
    %v2763 = vsel %vm957, %v2554, %v2550
    %v2764 = vsel %vm959, %v2558, %v2763
    %v2765 = vsel %vm961, %v2562, %v2764
    %v2766 = vsel %vm2678, %v2566, %v2765
    %v2767 = vsel %vm2680, %v2570, %v2766
    %v2768 = vsel %vm2682, %v2574, %v2767
    %v2769 = vsel %vm2684, %v2578, %v2768
    %v2770 = vsel %vm957, %v2586, %v2582
    %v2771 = vsel %vm959, %v2590, %v2770
    %v2772 = vsel %vm961, %v2594, %v2771
    %v2773 = vsel %vm2678, %v2598, %v2772
    %v2774 = vsel %vm2680, %v2602, %v2773
    %v2775 = vsel %vm2682, %v2606, %v2774
    %v2776 = vsel %vm2684, %v2610, %v2775
    %v2777 = vsel %vm957, %v2618, %v2614
    %v2778 = vsel %vm959, %v2622, %v2777
    %v2779 = vsel %vm961, %v2626, %v2778
    %v2780 = vsel %vm2678, %v2630, %v2779
    %v2781 = vsel %vm2680, %v2634, %v2780
    %v2782 = vsel %vm2682, %v2638, %v2781
    %v2783 = vsel %vm2684, %v2642, %v2782
    %v2784 = vsel %vm957, %v2650, %v2646
    %v2785 = vsel %vm959, %v2654, %v2784
    %v2786 = vsel %vm961, %v2658, %v2785
    %v2787 = vsel %vm2678, %v2662, %v2786
    %v2788 = vsel %vm2680, %v2666, %v2787
    %v2789 = vsel %vm2682, %v2670, %v2788
    %v2790 = vsel %vm2684, %v2674, %v2789
    %vm2807 = vcmask 31744
    %v2808 = vsel %vm2807, %v2685, 0.0
    %2809 = vadd.xlane.f32.xlu0 %v2808
    %v2810 = vpop.xlane.xlu0 %2809
    %v2811 = vsel %vm2807, %v2692, 0.0
    %2812 = vadd.xlane.f32.xlu0 %v2811
    %v2813 = vpop.xlane.xlu0 %2812
    %v2814 = vsel %vm2807, %v2699, 0.0
    %2815 = vadd.xlane.f32.xlu0 %v2814
    %v2816 = vpop.xlane.xlu0 %2815
    %v2817 = vsel %vm2807, %v2706, 0.0
    %2818 = vadd.xlane.f32.xlu0 %v2817
    %v2819 = vpop.xlane.xlu0 %2818
    %v2820 = vsel %vm2807, %v2713, 0.0
    %2821 = vadd.xlane.f32.xlu0 %v2820
    %v2822 = vpop.xlane.xlu0 %2821
    %v2823 = vsel %vm2807, %v2720, 0.0
    %2824 = vadd.xlane.f32.xlu0 %v2823
    %v2825 = vpop.xlane.xlu0 %2824
    %v2826 = vsel %vm2807, %v2727, 0.0
    %2827 = vadd.xlane.f32.xlu0 %v2826
    %v2828 = vpop.xlane.xlu0 %2827
    %v2829 = vsel %vm2807, %v2734, 0.0
    %2830 = vadd.xlane.f32.xlu0 %v2829
    %v2831 = vpop.xlane.xlu0 %2830
    %v2832 = vsel %vm2807, %v2741, 0.0
    %2833 = vadd.xlane.f32.xlu0 %v2832
    %v2834 = vpop.xlane.xlu0 %2833
    %v2835 = vsel %vm2807, %v2748, 0.0
    %2836 = vadd.xlane.f32.xlu0 %v2835
    %v2837 = vpop.xlane.xlu0 %2836
    %v2838 = vsel %vm2807, %v2755, 0.0
    %2839 = vadd.xlane.f32.xlu0 %v2838
    %v2840 = vpop.xlane.xlu0 %2839
    %v2841 = vsel %vm2807, %v2762, 0.0
    %2842 = vadd.xlane.f32.xlu0 %v2841
    %v2843 = vpop.xlane.xlu0 %2842
    %v2844 = vsel %vm2807, %v2769, 0.0
    %2845 = vadd.xlane.f32.xlu0 %v2844
    %v2846 = vpop.xlane.xlu0 %2845
    %v2847 = vsel %vm2807, %v2776, 0.0
    %2848 = vadd.xlane.f32.xlu0 %v2847
    %v2849 = vpop.xlane.xlu0 %2848
    %v2850 = vsel %vm2807, %v2783, 0.0
    %2851 = vadd.xlane.f32.xlu0 %v2850
    %v2852 = vpop.xlane.xlu0 %2851
    %v2853 = vsel %vm2807, %v2790, 0.0
    %2854 = vadd.xlane.f32.xlu0 %v2853
    %v2855 = vpop.xlane.xlu0 %2854
    %v2856 = vld [vmem:[%s4] sm:$0xff]
    %v2857 = vld [vmem:[%s4 + $0x8] sm:$0xff]
    %v2858 = vld [vmem:[%s4 + $0x10] sm:$0xff]
    %v2859 = vld [vmem:[%s4 + $0x18] sm:$0xff]
    %v2860 = vld [vmem:[%s4 + $0x20] sm:$0xff]
    %v2861 = vld [vmem:[%s4 + $0x28] sm:$0xff]
    %v2862 = vld [vmem:[%s4 + $0x30] sm:$0xff]
    %v2863 = vld [vmem:[%s4 + $0x38] sm:$0xff]
    %v2864 = vadd.f32 %v2810, %v2856
    %v2865 = vadd.f32 %v2813, %v2857
    %v2866 = vadd.f32 %v2816, %v2858
    %v2867 = vadd.f32 %v2819, %v2859
    %v2868 = vadd.f32 %v2822, %v2860
    %v2869 = vadd.f32 %v2825, %v2861
    %v2870 = vadd.f32 %v2828, %v2862
    %v2871 = vadd.f32 %v2831, %v2863
    %v2872 = vadd.f32 %v2834, %v2856
    %v2873 = vadd.f32 %v2837, %v2857
    %v2874 = vadd.f32 %v2840, %v2858
    %v2875 = vadd.f32 %v2843, %v2859
    %v2876 = vadd.f32 %v2846, %v2860
    %v2877 = vadd.f32 %v2849, %v2861
    %v2878 = vadd.f32 %v2852, %v2862
    %v2879 = vadd.f32 %v2855, %v2863
    %v2880 = vxor.u32 %v2864, 2147483648
    %v2881 = vxor.u32 %v2865, 2147483648
    %v2882 = vxor.u32 %v2866, 2147483648
    %v2883 = vxor.u32 %v2867, 2147483648
    %v2884 = vxor.u32 %v2868, 2147483648
    %v2885 = vxor.u32 %v2869, 2147483648
    %v2886 = vxor.u32 %v2870, 2147483648
    %v2887 = vxor.u32 %v2871, 2147483648
    %v2888 = vxor.u32 %v2872, 2147483648
    %v2889 = vxor.u32 %v2873, 2147483648
    %v2890 = vxor.u32 %v2874, 2147483648
    %v2891 = vxor.u32 %v2875, 2147483648
    %v2892 = vxor.u32 %v2876, 2147483648
    %v2893 = vxor.u32 %v2877, 2147483648
    %v2894 = vxor.u32 %v2878, 2147483648
    %v2895 = vxor.u32 %v2879, 2147483648
    %v2896 = vmul.f32 %v2880, 1.442695
    %v2897 = vpow.pop %v2896
    %v2898 = vmul.f32 %v2881, 1.442695
    %v2899 = vpow.pop %v2898
    %v2900 = vmul.f32 %v2882, 1.442695
    %v2901 = vpow.pop %v2900
    %v2902 = vmul.f32 %v2883, 1.442695
    %v2903 = vpow.pop %v2902
    %v2904 = vmul.f32 %v2884, 1.442695
    %v2905 = vpow.pop %v2904
    %v2906 = vmul.f32 %v2885, 1.442695
    %v2907 = vpow.pop %v2906
    %v2908 = vmul.f32 %v2886, 1.442695
    %v2909 = vpow.pop %v2908
    %v2910 = vmul.f32 %v2887, 1.442695
    %v2911 = vpow.pop %v2910
    %v2912 = vmul.f32 %v2888, 1.442695
    %v2913 = vpow.pop %v2912
    %v2914 = vmul.f32 %v2889, 1.442695
    %v2915 = vpow.pop %v2914
    %v2916 = vmul.f32 %v2890, 1.442695
    %v2917 = vpow.pop %v2916
    %v2918 = vmul.f32 %v2891, 1.442695
    %v2919 = vpow.pop %v2918
    %v2920 = vmul.f32 %v2892, 1.442695
    %v2921 = vpow.pop %v2920
    %v2922 = vmul.f32 %v2893, 1.442695
    %v2923 = vpow.pop %v2922
    %v2924 = vmul.f32 %v2894, 1.442695
    %v2925 = vpow.pop %v2924
    %v2926 = vmul.f32 %v2895, 1.442695
    %v2927 = vpow.pop %v2926
    %v2928 = vadd.f32 %v2897, 1.0
    %v2929 = vadd.f32 %v2899, 1.0
    %v2930 = vadd.f32 %v2901, 1.0
    %v2931 = vadd.f32 %v2903, 1.0
    %v2932 = vadd.f32 %v2905, 1.0
    %v2933 = vadd.f32 %v2907, 1.0
    %v2934 = vadd.f32 %v2909, 1.0
    %v2935 = vadd.f32 %v2911, 1.0
    %v2936 = vadd.f32 %v2913, 1.0
    %v2937 = vadd.f32 %v2915, 1.0
    %v2938 = vadd.f32 %v2917, 1.0
    %v2939 = vadd.f32 %v2919, 1.0
    %v2940 = vadd.f32 %v2921, 1.0
    %v2941 = vadd.f32 %v2923, 1.0
    %v2942 = vadd.f32 %v2925, 1.0
    %v2943 = vadd.f32 %v2927, 1.0
    %v2944 = vrcp.pop %v2928
    %v2945 = vmul.f32 1.0, %v2944
    %v2946 = vrcp.pop %v2929
    %v2947 = vmul.f32 1.0, %v2946
    %v2948 = vrcp.pop %v2930
    %v2949 = vmul.f32 1.0, %v2948
    %v2950 = vrcp.pop %v2931
    %v2951 = vmul.f32 1.0, %v2950
    %v2952 = vrcp.pop %v2932
    %v2953 = vmul.f32 1.0, %v2952
    %v2954 = vrcp.pop %v2933
    %v2955 = vmul.f32 1.0, %v2954
    %v2956 = vrcp.pop %v2934
    %v2957 = vmul.f32 1.0, %v2956
    %v2958 = vrcp.pop %v2935
    %v2959 = vmul.f32 1.0, %v2958
    %v2960 = vrcp.pop %v2936
    %v2961 = vmul.f32 1.0, %v2960
    %v2962 = vrcp.pop %v2937
    %v2963 = vmul.f32 1.0, %v2962
    %v2964 = vrcp.pop %v2938
    %v2965 = vmul.f32 1.0, %v2964
    %v2966 = vrcp.pop %v2939
    %v2967 = vmul.f32 1.0, %v2966
    %v2968 = vrcp.pop %v2940
    %v2969 = vmul.f32 1.0, %v2968
    %v2970 = vrcp.pop %v2941
    %v2971 = vmul.f32 1.0, %v2970
    %v2972 = vrcp.pop %v2942
    %v2973 = vmul.f32 1.0, %v2972
    %v2974 = vrcp.pop %v2943
    %v2975 = vmul.f32 1.0, %v2974
    %2977 = vset.pattern.permute.xlu0 0
    %2978 = vperm.xlu0 %2977, %v2945
    %v2979 = vpop.permute.xlu0 %2978
    %2982 = vset.pattern.permute.xlu0 0
    %2983 = vperm.xlu0 %2982, %v2947
    %v2984 = vpop.permute.xlu0 %2983
    %2987 = vset.pattern.permute.xlu0 0
    %2988 = vperm.xlu0 %2987, %v2949
    %v2989 = vpop.permute.xlu0 %2988
    %2992 = vset.pattern.permute.xlu0 0
    %2993 = vperm.xlu0 %2992, %v2951
    %v2994 = vpop.permute.xlu0 %2993
    %2997 = vset.pattern.permute.xlu0 0
    %2998 = vperm.xlu0 %2997, %v2953
    %v2999 = vpop.permute.xlu0 %2998
    %3002 = vset.pattern.permute.xlu0 0
    %3003 = vperm.xlu0 %3002, %v2955
    %v3004 = vpop.permute.xlu0 %3003
    %3007 = vset.pattern.permute.xlu0 0
    %3008 = vperm.xlu0 %3007, %v2957
    %v3009 = vpop.permute.xlu0 %3008
    %3012 = vset.pattern.permute.xlu0 0
    %3013 = vperm.xlu0 %3012, %v2959
    %v3014 = vpop.permute.xlu0 %3013
    %3017 = vset.pattern.permute.xlu0 0
    %3018 = vperm.xlu0 %3017, %v2961
    %v3019 = vpop.permute.xlu0 %3018
    %3022 = vset.pattern.permute.xlu0 0
    %3023 = vperm.xlu0 %3022, %v2963
    %v3024 = vpop.permute.xlu0 %3023
    %3027 = vset.pattern.permute.xlu0 0
    %3028 = vperm.xlu0 %3027, %v2965
    %v3029 = vpop.permute.xlu0 %3028
    %3032 = vset.pattern.permute.xlu0 0
    %3033 = vperm.xlu0 %3032, %v2967
    %v3034 = vpop.permute.xlu0 %3033
    %3037 = vset.pattern.permute.xlu0 0
    %3038 = vperm.xlu0 %3037, %v2969
    %v3039 = vpop.permute.xlu0 %3038
    %3042 = vset.pattern.permute.xlu0 0
    %3043 = vperm.xlu0 %3042, %v2971
    %v3044 = vpop.permute.xlu0 %3043
    %3047 = vset.pattern.permute.xlu0 0
    %3048 = vperm.xlu0 %3047, %v2973
    %v3049 = vpop.permute.xlu0 %3048
    %3052 = vset.pattern.permute.xlu0 0
    %3053 = vperm.xlu0 %3052, %v2975
    %v3054 = vpop.permute.xlu0 %3053
    %v3056 = vmul.f32 %v39, %v2979
    %v3057 = vmul.f32 %v40, %v2979
    %v3058 = vmul.f32 %v41, %v2984
    %v3059 = vmul.f32 %v42, %v2984
    %v3060 = vmul.f32 %v43, %v2989
    %v3061 = vmul.f32 %v44, %v2989
    %v3062 = vmul.f32 %v45, %v2994
    %v3063 = vmul.f32 %v46, %v2994
    %v3064 = vmul.f32 %v47, %v2999
    %v3065 = vmul.f32 %v48, %v2999
    %v3066 = vmul.f32 %v49, %v3004
    %v3067 = vmul.f32 %v50, %v3004
    %v3068 = vmul.f32 %v51, %v3009
    %v3069 = vmul.f32 %v52, %v3009
    %v3070 = vmul.f32 %v53, %v3014
    %v3071 = vmul.f32 %v54, %v3014
    %v3072 = vmul.f32 %v55, %v3019
    %v3073 = vmul.f32 %v56, %v3019
    %v3074 = vmul.f32 %v57, %v3024
    %v3075 = vmul.f32 %v58, %v3024
    %v3076 = vmul.f32 %v59, %v3029
    %v3077 = vmul.f32 %v60, %v3029
    %v3078 = vmul.f32 %v61, %v3034
    %v3079 = vmul.f32 %v62, %v3034
    %v3080 = vmul.f32 %v63, %v3039
    %v3081 = vmul.f32 %v64, %v3039
    %v3082 = vmul.f32 %v65, %v3044
    %v3083 = vmul.f32 %v66, %v3044
    %v3084 = vmul.f32 %v67, %v3049
    %v3085 = vmul.f32 %v68, %v3049
    %v3086 = vmul.f32 %v69, %v3054
    %v3087 = vmul.f32 %v70, %v3054
    %3088 = vst [vmem:[#allocation6] sm:$0xff] %v3056
    %3089 = vst [vmem:[#allocation6 + $0x8] sm:$0xff] %v3057
    %3090 = vst [vmem:[#allocation6 + $0x10] sm:$0xff] %v3058
    %3091 = vst [vmem:[#allocation6 + $0x18] sm:$0xff] %v3059
    %3092 = vst [vmem:[#allocation6 + $0x20] sm:$0xff] %v3060
    %3093 = vst [vmem:[#allocation6 + $0x28] sm:$0xff] %v3061
    %3094 = vst [vmem:[#allocation6 + $0x30] sm:$0xff] %v3062
    %3095 = vst [vmem:[#allocation6 + $0x38] sm:$0xff] %v3063
    %3096 = vst [vmem:[#allocation6 + $0x40] sm:$0xff] %v3064
    %3097 = vst [vmem:[#allocation6 + $0x48] sm:$0xff] %v3065
    %3098 = vst [vmem:[#allocation6 + $0x50] sm:$0xff] %v3066
    %3099 = vst [vmem:[#allocation6 + $0x58] sm:$0xff] %v3067
    %3100 = vst [vmem:[#allocation6 + $0x60] sm:$0xff] %v3068
    %3101 = vst [vmem:[#allocation6 + $0x68] sm:$0xff] %v3069
    %3102 = vst [vmem:[#allocation6 + $0x70] sm:$0xff] %v3070
    %3103 = vst [vmem:[#allocation6 + $0x78] sm:$0xff] %v3071
    %3104 = vst [vmem:[#allocation6 + $0x80] sm:$0xff] %v3072
    %3105 = vst [vmem:[#allocation6 + $0x88] sm:$0xff] %v3073
    %3106 = vst [vmem:[#allocation6 + $0x90] sm:$0xff] %v3074
    %3107 = vst [vmem:[#allocation6 + $0x98] sm:$0xff] %v3075
    %3108 = vst [vmem:[#allocation6 + $0xa0] sm:$0xff] %v3076
    %3109 = vst [vmem:[#allocation6 + $0xa8] sm:$0xff] %v3077
    %3110 = vst [vmem:[#allocation6 + $0xb0] sm:$0xff] %v3078
    %3111 = vst [vmem:[#allocation6 + $0xb8] sm:$0xff] %v3079
    %3112 = vst [vmem:[#allocation6 + $0xc0] sm:$0xff] %v3080
    %3113 = vst [vmem:[#allocation6 + $0xc8] sm:$0xff] %v3081
    %3114 = vst [vmem:[#allocation6 + $0xd0] sm:$0xff] %v3082
    %3115 = vst [vmem:[#allocation6 + $0xd8] sm:$0xff] %v3083
    %3116 = vst [vmem:[#allocation6 + $0xe0] sm:$0xff] %v3084
    %3117 = vst [vmem:[#allocation6 + $0xe8] sm:$0xff] %v3085
    %3118 = vst [vmem:[#allocation6 + $0xf0] sm:$0xff] %v3086
    %3119 = vst [vmem:[#allocation6 + $0xf8] sm:$0xff] %v3087
    // Predicated region
    $region30: #{tpu_custom_call.1} parent=1 // pred_check
      _
    $region31: #{tpu_custom_call.1} parent=1 // pred_check_branch
      %3121 = sbr.rel (0) target = $region33
    $region32: #{tpu_custom_call.1} parent=1 // pred_region
      %s3123 = ssub.s32 4096, 4096
      %3124 = vsyncadd [#allocation5], %s3123
      %s3125 = sshll.u32 [#allocation6], 4
      %s3126 = int_to_ptr.vmem [resolvable:$true] %s3125
      %3131 = dma.vmem_to_hbm [thread:$0]  %s3126, 4096, %s6, [#allocation5], 256, 256, 16
    $region33: #{tpu_custom_call.1} parent=1 // pred_fallthru
      _
    // Predicated region
    $region34: #{tpu_custom_call.1} parent=1 // pred_check
      _
    $region35: #{tpu_custom_call.1} parent=1 // pred_check_branch
      %3133 = sbr.rel (0) target = $region37
    $region36: #{tpu_custom_call.1} parent=1 // pred_region
      %3134 = dma.done [#allocation5], 4096
    $region37: #{tpu_custom_call.1} parent=1 // pred_fallthru
      _
    %3135 = vsyncpa [#allocation4], 1
    %3136 = vsyncpa [#allocation5], 1

</llo_original>
